<compile_context>
chip_gen: v7x
topology: tpu7x:2x2x1
jax: 0.10.0
libtpu: 0.0.40
codegen_flags: <defaults>
</compile_context>

<pallas_src>
import functools

import jax
import jax.numpy as jnp
from jax import lax
from jax.experimental import pallas as pl
from jax.experimental.pallas import tpu as pltpu


def _round_up(v, m):
    return -(-v // m) * m


# ----------------------------------------------------------------------------
# Quantization glue (eval-mode IntLSTMCell weight transform), plain JAX.
# ----------------------------------------------------------------------------
def emulate_int_minmax(w, bits=8):
    # TODO(synk): fairseq's emulate_int(method='histogram') uses a
    # HistogramObserver; approximated here with a MinMax observer (same affine
    # quantize/dequantize math, different scale/zero_point search).
    max_val = 2 ** bits - 1
    wmin = jnp.minimum(jnp.min(w), 0.0)
    wmax = jnp.maximum(jnp.max(w), 0.0)
    scale = jnp.maximum((wmax - wmin) / max_val, 1e-8)
    zero_point = jnp.clip(jnp.round(-wmin / scale), 0, max_val)
    wq = (jnp.clip(jnp.round(w / scale + zero_point), 0, max_val) - zero_point) * scale
    return wq, scale, zero_point


def eval_mode_weight(weight, bits=8):
    """Reproduces IntLSTMCell.forward weight processing with p=1 (eval)."""
    wq, scale, zero_point = emulate_int_minmax(weight, bits=bits)
    # p = 1  =>  mask = bernoulli(0) = all zeros  =>  noise = wq - w everywhere
    noise = wq - weight
    clamp_low = -scale * zero_point
    clamp_high = scale * (2 ** bits - 1 - zero_point)
    return jnp.clip(weight, clamp_low, clamp_high) + noise


def _pad_gate_cols(w, H, Hp):
    """(K, 4H) -> (K, 4Hp): pad each of the 4 gate column-blocks to Hp lanes."""
    if Hp == H:
        return w
    K = w.shape[0]
    w4 = w.reshape(K, 4, H)
    w4 = jnp.pad(w4, ((0, 0), (0, 0), (0, Hp - H)))
    return w4.reshape(K, 4 * Hp)


# ----------------------------------------------------------------------------
# Generation-aware sizing helpers.
# ----------------------------------------------------------------------------
_MAX_CHUNK = 128      # time steps per grid step (upper bound)
_UNROLL = 8           # bounded fori_loop unroll (review: avoid full unroll)


def _device_kind():
    try:
        return jax.devices()[0].device_kind.lower()
    except Exception:
        return ""


def _vmem_budget_bytes():
    """~75% of the generation's physical VMEM (headroom for internal scratch)."""
    try:
        cap = int(pltpu.get_tpu_info().vmem_capacity_bytes)
    except Exception:
        cap = 64 * (1 << 20)          # conservative fallback (v7x-sized)
    return int(cap) * 3 // 4          # v5e/v6e -> ~96 MiB, v7x -> 48 MiB


def _num_batch_blocks(B):
    """nb=1 on v5e/v6e (1 TC/chip); nb=2 on v7x only if each core keeps a
    full-MXU-M batch block (>=128 rows, sublane-aligned)."""
    kind = _device_kind()
    if "v7" in kind and B % 32 == 0 and (B // 2) >= 128:
        return 2
    return 1


def _pick_chunk(seq_len, Bb, Hp, budget):
    """Largest time chunk whose double-buffered working set fits `budget`."""
    # Resident / non-chunk-scaling VMEM:
    #   Wh (Hp, 4Hp) bf16 — conservatively counted double-buffered even though
    #   its constant (0,0) index_map means it is only fetched once.
    #   h0/c0/h_n/c_n blocks + h/c scratch: f32 (Bb, Hp) each.
    fixed = 2 * (Hp * (4 * Hp) * 2) + 8 * (Bb * Hp * 4)
    # Per unit of chunk (double-buffered streaming blocks, bf16):
    #   xproj row (Bb, 4Hp) + out row (Bb, Hp)
    per_step = 2 * (Bb * (4 * Hp) * 2) + 2 * (Bb * Hp * 2)
    chunk = (budget - fixed) // max(per_step, 1)
    chunk = max(1, min(_MAX_CHUNK, seq_len, chunk))
    if chunk > _UNROLL:
        chunk -= chunk % _UNROLL      # keep the unrolled loop remainder-free
    return int(chunk)


# ----------------------------------------------------------------------------
# Pallas kernel: one LSTM layer. Grid = (batch_blocks, time_chunks).
# Only the recurrent part (h @ Wh + gate math) runs per timestep; the
# x-projection arrives precomputed (bf16).
# ----------------------------------------------------------------------------
def lstm_layer_kernel(xproj_ref, wh_ref, h0_ref, c0_ref,
                      out_ref, hn_ref, cn_ref,
                      h_sc, c_sc, *, hidden_pad, chunk, seq_len, padded_len,
                      unroll):
    t_chunk = pl.program_id(1)
    last_chunk = pl.num_programs(1) - 1
    Hp = hidden_pad

    # New batch block begins whenever the inner time index wraps to 0.
    @pl.when(t_chunk == 0)
    def _():
        h_sc[...] = h0_ref[...]
        c_sc[...] = c0_ref[...]

    wh = wh_ref[...]                      # (Hp, 4Hp) bf16, hoisted out of loop

    def make_step(masked):
        def step(s, carry):
            h, c = carry                  # (Bb, Hp) f32
            gates = (xproj_ref[s].astype(jnp.float32)
                     + jnp.dot(h.astype(wh.dtype), wh,
                               preferred_element_type=jnp.float32))
            # Gate order follows IntLSTMCell: [f, i, o] from fio_linear, then u.
            f = jax.nn.sigmoid(gates[:, 0 * Hp:1 * Hp])
            i = jax.nn.sigmoid(gates[:, 1 * Hp:2 * Hp])
            o = jax.nn.sigmoid(gates[:, 2 * Hp:3 * Hp])
            u = jnp.tanh(gates[:, 3 * Hp:4 * Hp])
            c_new = i * u + f * c
            h_new = o * jnp.tanh(c_new)
            if masked:                    # only the tail chunk pays the selects
                valid = (t_chunk * chunk + s) < seq_len
                h_new = jnp.where(valid, h_new, h)
                c_new = jnp.where(valid, c_new, c)
            out_ref[s] = h_new.astype(out_ref.dtype)
            return h_new, c_new
        return step

    def run_chunk(masked):
        h, c = lax.fori_loop(0, chunk, make_step(masked),
                             (h_sc[...], c_sc[...]), unroll=unroll)
        h_sc[...] = h
        c_sc[...] = c

    if padded_len != seq_len:
        # Pad steps only exist in the final time chunk: keep every other
        # chunk on the unmasked fast path (no per-step full-tile selects).
        @pl.when(t_chunk != last_chunk)
        def _():
            run_chunk(False)

        @pl.when(t_chunk == last_chunk)
        def _():
            run_chunk(True)
    else:
        run_chunk(False)

    @pl.when(t_chunk == last_chunk)
    def _():
        hn_ref[...] = h_sc[...].astype(hn_ref.dtype)
        cn_ref[...] = c_sc[...].astype(cn_ref.dtype)


def run_lstm_layer(x, weight_eff, bias, h0, c0, *, hidden_size, input_size,
                   seq_len):
    """One unidirectional LSTM layer.

    x:          (T_in, B, I_eff) f32 or bf16; rows >= seq_len are padding,
                feature columns >= input_size are zero-padding.
    weight_eff: (4H, input_size + H) effective (fake-quantized) weight.
    Returns:    out   (T_pad, B, Hp) bf16  (time/hidden padded, fed to next layer)
                h_n   (B, Hp) f32
                c_n   (B, Hp) f32
    """
    T_in, B, I_eff = x.shape
    H = hidden_size
    I = input_size
    Hp = _round_up(H, 128)                # lane-dense gates / output store

    # Split weight into input / recurrent parts; pad each gate to Hp lanes.
    wx = jnp.transpose(weight_eff[:, :I])                 # (I, 4H)
    wh = jnp.transpose(weight_eff[:, I:])                 # (H, 4H)
    wx_p = _pad_gate_cols(wx, H, Hp)                      # (I, 4Hp)
    if I_eff != I:                                        # zero rows for padded
        wx_p = jnp.pad(wx_p, ((0, I_eff - I), (0, 0)))    # input features
    wh_p = jnp.pad(_pad_gate_cols(wh, H, Hp),
                   ((0, Hp - H), (0, 0)))                 # (Hp, 4Hp)
    b_p = _pad_gate_cols(bias.reshape(1, 4 * H), H, Hp)   # (1, 4Hp) f32

    wx_bf = wx_p.astype(jnp.bfloat16)
    # NOTE: Wh is int8 fake-quantized already; on v5e/v6e an int8 MXU path
    # (+ zero-point row-sum dequant correction) would double matmul throughput.
    # Kept bf16 for portability (v7x MXU has no int path).
    wh_bf = wh_p.astype(jnp.bfloat16)

    # Generation-aware batch split / chunk / VMEM budget.
    nb = _num_batch_blocks(B)
    Bb = B // nb
    budget = _vmem_budget_bytes()
    chunk = _pick_chunk(seq_len, Bb, Hp, budget)
    unroll = min(_UNROLL, chunk)
    n_chunks = -(-seq_len // chunk)
    T_pad = n_chunks * chunk

    # Hoisted input projection: one big MXU-efficient matmul outside the
    # serial recurrence (bf16 operands, f32 accumulation + bias), stored bf16
    # to halve the recurrence's HBM read traffic and its VMEM blocks.
    xproj = (jnp.dot(x.astype(jnp.bfloat16).reshape(T_in * B, I_eff), wx_bf,
                     preferred_element_type=jnp.float32) + b_p)
    xproj = xproj.astype(jnp.bfloat16).reshape(T_in, B, 4 * Hp)
    if T_pad > T_in:
        xproj = jnp.pad(xproj, ((0, T_pad - T_in), (0, 0), (0, 0)))
    elif T_pad < T_in:
        xproj = xproj[:T_pad]

    h0_p = jnp.pad(h0, ((0, 0), (0, Hp - H))).astype(jnp.float32)
    c0_p = jnp.pad(c0, ((0, 0), (0, Hp - H))).astype(jnp.float32)

    kernel = functools.partial(lstm_layer_kernel, hidden_pad=Hp, chunk=chunk,
                               seq_len=seq_len, padded_len=T_pad,
                               unroll=unroll)

    out, h_n, c_n = pl.pallas_call(
        kernel,
        out_shape=(
            jax.ShapeDtypeStruct((T_pad, B, Hp), jnp.bfloat16),   # streamed h
            jax.ShapeDtypeStruct((B, Hp), jnp.float32),           # h_n
            jax.ShapeDtypeStruct((B, Hp), jnp.float32),           # c_n
        ),
        grid_spec=pltpu.PrefetchScalarGridSpec(
            num_scalar_prefetch=0,
            grid=(nb, n_chunks),
            in_specs=[
                pl.BlockSpec((chunk, Bb, 4 * Hp), lambda b, t: (t, b, 0)),  # xproj
                pl.BlockSpec((Hp, 4 * Hp), lambda b, t: (0, 0)),            # Wh
                pl.BlockSpec((Bb, Hp), lambda b, t: (b, 0)),                # h0
                pl.BlockSpec((Bb, Hp), lambda b, t: (b, 0)),                # c0
            ],
            out_specs=[
                pl.BlockSpec((chunk, Bb, Hp), lambda b, t: (t, b, 0)),      # out
                pl.BlockSpec((Bb, Hp), lambda b, t: (b, 0)),                # h_n
                pl.BlockSpec((Bb, Hp), lambda b, t: (b, 0)),                # c_n
            ],
            scratch_shapes=[
                pltpu.VMEM((Bb, Hp), jnp.float32),                          # h carry
                pltpu.VMEM((Bb, Hp), jnp.float32),                          # c carry
            ],
        ),
        compiler_params=pltpu.CompilerParams(
            dimension_semantics=("parallel", "arbitrary"),  # batch ∥, time serial
            vmem_limit_bytes=budget,
        ),
    )(xproj, wh_bf, h0_p, c0_p)

    return out, h_n, c_n


# ----------------------------------------------------------------------------
# LSTMFrame forward (unidirectional, uniform-length, eval mode).
# ----------------------------------------------------------------------------
def lstm_frame_forward(x, layer_params, hidden_size, init_state=None):
    """
    x: (seq_len, batch, input_size)
    layer_params: list of (weight (4H, in+H), bias (4H,)) per layer
    returns: (output (T, B, H), (h_n (L, B, H), c_n (L, B, H)))
    """
    T, B, I0 = x.shape
    L = len(layer_params)
    H = hidden_size
    if init_state is None:
        h0s = [jnp.zeros((B, H), jnp.float32) for _ in range(L)]
        c0s = [jnp.zeros((B, H), jnp.float32) for _ in range(L)]
    else:
        h0s, c0s = init_state

    last_h, last_c = [], []
    layer_in = x
    in_features = I0
    # Inter-layer activations stay in the padded (T_pad, B, Hp) bf16 form so
    # no per-layer slice/cast copy round-trips through HBM.
    # TODO(synk): consecutive layers still round-trip the (T_pad,B,Hp)
    # activation through HBM; a fused wavefront-over-time-chunks kernel would
    # avoid it.
    for layer_idx, (weight, bias) in enumerate(layer_params):
        # eval mode: dropout is a no-op
        weight_eff = eval_mode_weight(weight, bits=8)
        layer_in, h_n, c_n = run_lstm_layer(
            layer_in, weight_eff, bias, h0s[layer_idx], c0s[layer_idx],
            hidden_size=H, input_size=in_features, seq_len=T)
        in_features = H
        last_h.append(h_n[:, :H])
        last_c.append(c_n[:, :H])

    output = layer_in[:T, :, :H].astype(jnp.float32)   # single final slice/cast
    h_n = jnp.stack(last_h, axis=0)
    c_n = jnp.stack(last_c, axis=0)
    return output, (h_n, c_n)


# ----------------------------------------------------------------------------
# Deterministic parameter init (xavier_uniform weight, zero bias).
# ----------------------------------------------------------------------------
def init_cell_params(key, input_size, hidden_size):
    in_features = input_size + hidden_size
    out_features = hidden_size * 4
    bound = jnp.sqrt(6.0 / (in_features + out_features))
    weight = jax.random.uniform(key, (out_features, in_features),
                                jnp.float32, -bound, bound)
    bias = jnp.zeros((out_features,), jnp.float32)
    return weight, bias


if __name__ == "__main__":
    seq_len, batch, input_size, hidden_size, num_layers = 8, 8, 16, 32, 2

    key = jax.random.PRNGKey(0)
    key_x, key_w0, key_w1 = jax.random.split(key, 3)

    x = jax.random.normal(key_x, (seq_len, batch, input_size), jnp.float32)
    layer_params = [
        init_cell_params(key_w0, input_size, hidden_size),
        init_cell_params(key_w1, hidden_size, hidden_size),
    ][:num_layers]

    fwd = jax.jit(functools.partial(lstm_frame_forward, hidden_size=hidden_size))
    output, (h_n, c_n) = fwd(x, layer_params)
    jax.block_until_ready((output, h_n, c_n))

    assert output.shape == (seq_len, batch, hidden_size)
    assert h_n.shape == (num_layers, batch, hidden_size)
    assert c_n.shape == (num_layers, batch, hidden_size)
    assert bool(jnp.all(jnp.isfinite(output)))
    assert bool(jnp.all(jnp.isfinite(h_n)))
    assert bool(jnp.all(jnp.isfinite(c_n)))
    print("KERNEL_OK")
</pallas_src>

<mosaic_0001>
module attributes {stable_mosaic.version = 11 : i64} {
  func.func @lstm_layer_kernel(%arg0: i32, %arg1: i32, %arg2: memref<8x8x512xbf16, #tpu.memory_space<vmem>>, %arg3: memref<128x512xbf16, #tpu.memory_space<vmem>>, %arg4: memref<8x128xf32, #tpu.memory_space<vmem>>, %arg5: memref<8x128xf32, #tpu.memory_space<vmem>>, %arg6: memref<8x8x128xbf16, #tpu.memory_space<vmem>>, %arg7: memref<8x128xf32, #tpu.memory_space<vmem>>, %arg8: memref<8x128xf32, #tpu.memory_space<vmem>>, %arg9: memref<8x128xf32, #tpu.memory_space<vmem>>, %arg10: memref<8x128xf32, #tpu.memory_space<vmem>>) attributes {dimension_semantics = [#tpu.dimension_semantics<parallel>, #tpu.dimension_semantics<arbitrary>], iteration_bounds = array<i64: 1, 1>, scalar_prefetch = 0 : i64, scratch_operands = 2 : i64, tpu.core_type = #tpu.core_type<tc>, window_params = [{transform_indices = @transform_0, window_bounds = array<i64: 8, 8, 512>}, {pipeline_mode = #tpu.pipeline_mode<synchronous>, transform_indices = @transform_1, window_bounds = array<i64: 128, 512>}, {transform_indices = @transform_2, window_bounds = array<i64: 8, 128>}, {transform_indices = @transform_3, window_bounds = array<i64: 8, 128>}, {transform_indices = @transform_4, window_bounds = array<i64: 8, 8, 128>}, {transform_indices = @transform_5, window_bounds = array<i64: 8, 128>}, {transform_indices = @transform_6, window_bounds = array<i64: 8, 128>}]} {
    %c0_i32 = arith.constant 0 : i32
    %0 = arith.cmpi eq, %arg1, %c0_i32 : i32
    %1 = arith.extui %0 : i1 to i32
    %c0_i32_0 = arith.constant 0 : i32
    %2 = arith.cmpi ne, %1, %c0_i32_0 : i32
    scf.if %2 {
      %c0_76 = arith.constant 0 : index
      %c0_77 = arith.constant 0 : index
      %307 = vector.load %arg4[%c0_76, %c0_77] : memref<8x128xf32, #tpu.memory_space<vmem>>, vector<8x128xf32>
      %c0_78 = arith.constant 0 : index
      %c0_79 = arith.constant 0 : index
      %308 = vector.load %arg9[%c0_78, %c0_79] : memref<8x128xf32, #tpu.memory_space<vmem>>, vector<8x128xf32>
      tpu.vector_store %arg9[%c0_78, %c0_79], %307 {strides = array<i32>} : memref<8x128xf32, #tpu.memory_space<vmem>>, vector<8x128xf32>,
      %c0_80 = arith.constant 0 : index
      %c0_81 = arith.constant 0 : index
      %309 = vector.load %arg5[%c0_80, %c0_81] : memref<8x128xf32, #tpu.memory_space<vmem>>, vector<8x128xf32>
      %c0_82 = arith.constant 0 : index
      %c0_83 = arith.constant 0 : index
      %310 = vector.load %arg10[%c0_82, %c0_83] : memref<8x128xf32, #tpu.memory_space<vmem>>, vector<8x128xf32>
      tpu.vector_store %arg10[%c0_82, %c0_83], %309 {strides = array<i32>} : memref<8x128xf32, #tpu.memory_space<vmem>>, vector<8x128xf32>,
    } else {
    }
    %c0 = arith.constant 0 : index
    %c0_1 = arith.constant 0 : index
    %3 = vector.load %arg3[%c0, %c0_1] : memref<128x512xbf16, #tpu.memory_space<vmem>>, vector<128x512xbf16>
    %c0_2 = arith.constant 0 : index
    %c0_3 = arith.constant 0 : index
    %4 = vector.load %arg9[%c0_2, %c0_3] : memref<8x128xf32, #tpu.memory_space<vmem>>, vector<8x128xf32>
    %c0_4 = arith.constant 0 : index
    %c0_5 = arith.constant 0 : index
    %5 = vector.load %arg10[%c0_4, %c0_5] : memref<8x128xf32, #tpu.memory_space<vmem>>, vector<8x128xf32>
    %c0_i32_6 = arith.constant 0 : i32
    %6 = arith.index_cast %c0_i32_6 : i32 to index
    %c0_7 = arith.constant 0 : index
    %c0_8 = arith.constant 0 : index
    %7 = vector.load %arg2[%6, %c0_7, %c0_8] : memref<8x8x512xbf16, #tpu.memory_space<vmem>>, vector<1x8x512xbf16>
    %8 = vector.shape_cast %7 : vector<1x8x512xbf16> to vector<8x512xbf16>
    %9 = arith.extf %8 : vector<8x512xbf16> to vector<8x512xf32>
    %10 = arith.truncf %4 : vector<8x128xf32> to vector<8x128xbf16>
    %cst = arith.constant dense<0.000000e+00> : vector<8x512xf32>
    %11 = tpu.matmul %10, %3, %cst {dimension_numbers = #tpu.dot_dimension_numbers<[1], [0], [0], [1], [0, 0, 1, 1], [], []>} : vector<8x128xbf16>, vector<128x512xbf16>, vector<8x512xf32> -> vector<8x512xf32>
    %12 = arith.addf %9, %11 : vector<8x512xf32>
    %13 = vector.extract_strided_slice %12 {offsets = [0, 0], sizes = [8, 128], strides = [1, 1]} : vector<8x512xf32> to vector<8x128xf32>
    %14 = arith.negf %13 : vector<8x128xf32>
    %15 = math.exp %14 : vector<8x128xf32>
    %cst_9 = arith.constant 1.000000e+00 : f32
    %16 = vector.broadcast %cst_9 : f32 to vector<8x128xf32>
    %17 = arith.addf %16, %15 : vector<8x128xf32>
    %18 = arith.divf %16, %17 : vector<8x128xf32>
    %19 = vector.extract_strided_slice %12 {offsets = [0, 128], sizes = [8, 128], strides = [1, 1]} : vector<8x512xf32> to vector<8x128xf32>
    %20 = arith.negf %19 : vector<8x128xf32>
    %21 = math.exp %20 : vector<8x128xf32>
    %cst_10 = arith.constant 1.000000e+00 : f32
    %22 = vector.broadcast %cst_10 : f32 to vector<8x128xf32>
    %23 = arith.addf %22, %21 : vector<8x128xf32>
    %24 = arith.divf %22, %23 : vector<8x128xf32>
    %25 = vector.extract_strided_slice %12 {offsets = [0, 256], sizes = [8, 128], strides = [1, 1]} : vector<8x512xf32> to vector<8x128xf32>
    %26 = arith.negf %25 : vector<8x128xf32>
    %27 = math.exp %26 : vector<8x128xf32>
    %cst_11 = arith.constant 1.000000e+00 : f32
    %28 = vector.broadcast %cst_11 : f32 to vector<8x128xf32>
    %29 = arith.addf %28, %27 : vector<8x128xf32>
    %30 = arith.divf %28, %29 : vector<8x128xf32>
    %31 = vector.extract_strided_slice %12 {offsets = [0, 384], sizes = [8, 128], strides = [1, 1]} : vector<8x512xf32> to vector<8x128xf32>
    %32 = math.tanh %31 : vector<8x128xf32>
    %33 = arith.mulf %24, %32 : vector<8x128xf32>
    %34 = arith.mulf %18, %5 : vector<8x128xf32>
    %35 = arith.addf %33, %34 : vector<8x128xf32>
    %36 = math.tanh %35 : vector<8x128xf32>
    %37 = arith.mulf %30, %36 : vector<8x128xf32>
    %38 = arith.truncf %37 : vector<8x128xf32> to vector<8x128xbf16>
    %39 = arith.index_cast %c0_i32_6 : i32 to index
    %c0_12 = arith.constant 0 : index
    %c0_13 = arith.constant 0 : index
    %40 = vector.load %arg6[%39, %c0_12, %c0_13] : memref<8x8x128xbf16, #tpu.memory_space<vmem>>, vector<1x8x128xbf16>
    %41 = vector.shape_cast %40 : vector<1x8x128xbf16> to vector<8x128xbf16>
    %42 = vector.shape_cast %38 : vector<8x128xbf16> to vector<1x8x128xbf16>
    tpu.vector_store %arg6[%39, %c0_12, %c0_13], %42 {strides = array<i32>} : memref<8x8x128xbf16, #tpu.memory_space<vmem>>, vector<1x8x128xbf16>,
    %c1_i32 = arith.constant 1 : i32
    %43 = arith.index_cast %c1_i32 : i32 to index
    %c0_14 = arith.constant 0 : index
    %c0_15 = arith.constant 0 : index
    %44 = vector.load %arg2[%43, %c0_14, %c0_15] : memref<8x8x512xbf16, #tpu.memory_space<vmem>>, vector<1x8x512xbf16>
    %45 = vector.shape_cast %44 : vector<1x8x512xbf16> to vector<8x512xbf16>
    %46 = arith.extf %45 : vector<8x512xbf16> to vector<8x512xf32>
    %47 = arith.truncf %37 : vector<8x128xf32> to vector<8x128xbf16>
    %cst_16 = arith.constant dense<0.000000e+00> : vector<8x512xf32>
    %48 = tpu.matmul %47, %3, %cst_16 {dimension_numbers = #tpu.dot_dimension_numbers<[1], [0], [0], [1], [0, 0, 1, 1], [], []>} : vector<8x128xbf16>, vector<128x512xbf16>, vector<8x512xf32> -> vector<8x512xf32>
    %49 = arith.addf %46, %48 : vector<8x512xf32>
    %50 = vector.extract_strided_slice %49 {offsets = [0, 0], sizes = [8, 128], strides = [1, 1]} : vector<8x512xf32> to vector<8x128xf32>
    %51 = arith.negf %50 : vector<8x128xf32>
    %52 = math.exp %51 : vector<8x128xf32>
    %cst_17 = arith.constant 1.000000e+00 : f32
    %53 = vector.broadcast %cst_17 : f32 to vector<8x128xf32>
    %54 = arith.addf %53, %52 : vector<8x128xf32>
    %55 = arith.divf %53, %54 : vector<8x128xf32>
    %56 = vector.extract_strided_slice %49 {offsets = [0, 128], sizes = [8, 128], strides = [1, 1]} : vector<8x512xf32> to vector<8x128xf32>
    %57 = arith.negf %56 : vector<8x128xf32>
    %58 = math.exp %57 : vector<8x128xf32>
    %cst_18 = arith.constant 1.000000e+00 : f32
    %59 = vector.broadcast %cst_18 : f32 to vector<8x128xf32>
    %60 = arith.addf %59, %58 : vector<8x128xf32>
    %61 = arith.divf %59, %60 : vector<8x128xf32>
    %62 = vector.extract_strided_slice %49 {offsets = [0, 256], sizes = [8, 128], strides = [1, 1]} : vector<8x512xf32> to vector<8x128xf32>
    %63 = arith.negf %62 : vector<8x128xf32>
    %64 = math.exp %63 : vector<8x128xf32>
    %cst_19 = arith.constant 1.000000e+00 : f32
    %65 = vector.broadcast %cst_19 : f32 to vector<8x128xf32>
    %66 = arith.addf %65, %64 : vector<8x128xf32>
    %67 = arith.divf %65, %66 : vector<8x128xf32>
    %68 = vector.extract_strided_slice %49 {offsets = [0, 384], sizes = [8, 128], strides = [1, 1]} : vector<8x512xf32> to vector<8x128xf32>
    %69 = math.tanh %68 : vector<8x128xf32>
    %70 = arith.mulf %61, %69 : vector<8x128xf32>
    %71 = arith.mulf %55, %35 : vector<8x128xf32>
    %72 = arith.addf %70, %71 : vector<8x128xf32>
    %73 = math.tanh %72 : vector<8x128xf32>
    %74 = arith.mulf %67, %73 : vector<8x128xf32>
    %75 = arith.truncf %74 : vector<8x128xf32> to vector<8x128xbf16>
    %76 = arith.index_cast %c1_i32 : i32 to index
    %c0_20 = arith.constant 0 : index
    %c0_21 = arith.constant 0 : index
    %77 = vector.load %arg6[%76, %c0_20, %c0_21] : memref<8x8x128xbf16, #tpu.memory_space<vmem>>, vector<1x8x128xbf16>
    %78 = vector.shape_cast %77 : vector<1x8x128xbf16> to vector<8x128xbf16>
    %79 = vector.shape_cast %75 : vector<8x128xbf16> to vector<1x8x128xbf16>
    tpu.vector_store %arg6[%76, %c0_20, %c0_21], %79 {strides = array<i32>} : memref<8x8x128xbf16, #tpu.memory_space<vmem>>, vector<1x8x128xbf16>,
    %c2_i32 = arith.constant 2 : i32
    %80 = arith.index_cast %c2_i32 : i32 to index
    %c0_22 = arith.constant 0 : index
    %c0_23 = arith.constant 0 : index
    %81 = vector.load %arg2[%80, %c0_22, %c0_23] : memref<8x8x512xbf16, #tpu.memory_space<vmem>>, vector<1x8x512xbf16>
    %82 = vector.shape_cast %81 : vector<1x8x512xbf16> to vector<8x512xbf16>
    %83 = arith.extf %82 : vector<8x512xbf16> to vector<8x512xf32>
    %84 = arith.truncf %74 : vector<8x128xf32> to vector<8x128xbf16>
    %cst_24 = arith.constant dense<0.000000e+00> : vector<8x512xf32>
    %85 = tpu.matmul %84, %3, %cst_24 {dimension_numbers = #tpu.dot_dimension_numbers<[1], [0], [0], [1], [0, 0, 1, 1], [], []>} : vector<8x128xbf16>, vector<128x512xbf16>, vector<8x512xf32> -> vector<8x512xf32>
    %86 = arith.addf %83, %85 : vector<8x512xf32>
    %87 = vector.extract_strided_slice %86 {offsets = [0, 0], sizes = [8, 128], strides = [1, 1]} : vector<8x512xf32> to vector<8x128xf32>
    %88 = arith.negf %87 : vector<8x128xf32>
    %89 = math.exp %88 : vector<8x128xf32>
    %cst_25 = arith.constant 1.000000e+00 : f32
    %90 = vector.broadcast %cst_25 : f32 to vector<8x128xf32>
    %91 = arith.addf %90, %89 : vector<8x128xf32>
    %92 = arith.divf %90, %91 : vector<8x128xf32>
    %93 = vector.extract_strided_slice %86 {offsets = [0, 128], sizes = [8, 128], strides = [1, 1]} : vector<8x512xf32> to vector<8x128xf32>
    %94 = arith.negf %93 : vector<8x128xf32>
    %95 = math.exp %94 : vector<8x128xf32>
    %cst_26 = arith.constant 1.000000e+00 : f32
    %96 = vector.broadcast %cst_26 : f32 to vector<8x128xf32>
    %97 = arith.addf %96, %95 : vector<8x128xf32>
    %98 = arith.divf %96, %97 : vector<8x128xf32>
    %99 = vector.extract_strided_slice %86 {offsets = [0, 256], sizes = [8, 128], strides = [1, 1]} : vector<8x512xf32> to vector<8x128xf32>
    %100 = arith.negf %99 : vector<8x128xf32>
    %101 = math.exp %100 : vector<8x128xf32>
    %cst_27 = arith.constant 1.000000e+00 : f32
    %102 = vector.broadcast %cst_27 : f32 to vector<8x128xf32>
    %103 = arith.addf %102, %101 : vector<8x128xf32>
    %104 = arith.divf %102, %103 : vector<8x128xf32>
    %105 = vector.extract_strided_slice %86 {offsets = [0, 384], sizes = [8, 128], strides = [1, 1]} : vector<8x512xf32> to vector<8x128xf32>
    %106 = math.tanh %105 : vector<8x128xf32>
    %107 = arith.mulf %98, %106 : vector<8x128xf32>
    %108 = arith.mulf %92, %72 : vector<8x128xf32>
    %109 = arith.addf %107, %108 : vector<8x128xf32>
    %110 = math.tanh %109 : vector<8x128xf32>
    %111 = arith.mulf %104, %110 : vector<8x128xf32>
    %112 = arith.truncf %111 : vector<8x128xf32> to vector<8x128xbf16>
    %113 = arith.index_cast %c2_i32 : i32 to index
    %c0_28 = arith.constant 0 : index
    %c0_29 = arith.constant 0 : index
    %114 = vector.load %arg6[%113, %c0_28, %c0_29] : memref<8x8x128xbf16, #tpu.memory_space<vmem>>, vector<1x8x128xbf16>
    %115 = vector.shape_cast %114 : vector<1x8x128xbf16> to vector<8x128xbf16>
    %116 = vector.shape_cast %112 : vector<8x128xbf16> to vector<1x8x128xbf16>
    tpu.vector_store %arg6[%113, %c0_28, %c0_29], %116 {strides = array<i32>} : memref<8x8x128xbf16, #tpu.memory_space<vmem>>, vector<1x8x128xbf16>,
    %c3_i32 = arith.constant 3 : i32
    %117 = arith.index_cast %c3_i32 : i32 to index
    %c0_30 = arith.constant 0 : index
    %c0_31 = arith.constant 0 : index
    %118 = vector.load %arg2[%117, %c0_30, %c0_31] : memref<8x8x512xbf16, #tpu.memory_space<vmem>>, vector<1x8x512xbf16>
    %119 = vector.shape_cast %118 : vector<1x8x512xbf16> to vector<8x512xbf16>
    %120 = arith.extf %119 : vector<8x512xbf16> to vector<8x512xf32>
    %121 = arith.truncf %111 : vector<8x128xf32> to vector<8x128xbf16>
    %cst_32 = arith.constant dense<0.000000e+00> : vector<8x512xf32>
    %122 = tpu.matmul %121, %3, %cst_32 {dimension_numbers = #tpu.dot_dimension_numbers<[1], [0], [0], [1], [0, 0, 1, 1], [], []>} : vector<8x128xbf16>, vector<128x512xbf16>, vector<8x512xf32> -> vector<8x512xf32>
    %123 = arith.addf %120, %122 : vector<8x512xf32>
    %124 = vector.extract_strided_slice %123 {offsets = [0, 0], sizes = [8, 128], strides = [1, 1]} : vector<8x512xf32> to vector<8x128xf32>
    %125 = arith.negf %124 : vector<8x128xf32>
    %126 = math.exp %125 : vector<8x128xf32>
    %cst_33 = arith.constant 1.000000e+00 : f32
    %127 = vector.broadcast %cst_33 : f32 to vector<8x128xf32>
    %128 = arith.addf %127, %126 : vector<8x128xf32>
    %129 = arith.divf %127, %128 : vector<8x128xf32>
    %130 = vector.extract_strided_slice %123 {offsets = [0, 128], sizes = [8, 128], strides = [1, 1]} : vector<8x512xf32> to vector<8x128xf32>
    %131 = arith.negf %130 : vector<8x128xf32>
    %132 = math.exp %131 : vector<8x128xf32>
    %cst_34 = arith.constant 1.000000e+00 : f32
    %133 = vector.broadcast %cst_34 : f32 to vector<8x128xf32>
    %134 = arith.addf %133, %132 : vector<8x128xf32>
    %135 = arith.divf %133, %134 : vector<8x128xf32>
    %136 = vector.extract_strided_slice %123 {offsets = [0, 256], sizes = [8, 128], strides = [1, 1]} : vector<8x512xf32> to vector<8x128xf32>
    %137 = arith.negf %136 : vector<8x128xf32>
    %138 = math.exp %137 : vector<8x128xf32>
    %cst_35 = arith.constant 1.000000e+00 : f32
    %139 = vector.broadcast %cst_35 : f32 to vector<8x128xf32>
    %140 = arith.addf %139, %138 : vector<8x128xf32>
    %141 = arith.divf %139, %140 : vector<8x128xf32>
    %142 = vector.extract_strided_slice %123 {offsets = [0, 384], sizes = [8, 128], strides = [1, 1]} : vector<8x512xf32> to vector<8x128xf32>
    %143 = math.tanh %142 : vector<8x128xf32>
    %144 = arith.mulf %135, %143 : vector<8x128xf32>
    %145 = arith.mulf %129, %109 : vector<8x128xf32>
    %146 = arith.addf %144, %145 : vector<8x128xf32>
    %147 = math.tanh %146 : vector<8x128xf32>
    %148 = arith.mulf %141, %147 : vector<8x128xf32>
    %149 = arith.truncf %148 : vector<8x128xf32> to vector<8x128xbf16>
    %150 = arith.index_cast %c3_i32 : i32 to index
    %c0_36 = arith.constant 0 : index
    %c0_37 = arith.constant 0 : index
    %151 = vector.load %arg6[%150, %c0_36, %c0_37] : memref<8x8x128xbf16, #tpu.memory_space<vmem>>, vector<1x8x128xbf16>
    %152 = vector.shape_cast %151 : vector<1x8x128xbf16> to vector<8x128xbf16>
    %153 = vector.shape_cast %149 : vector<8x128xbf16> to vector<1x8x128xbf16>
    tpu.vector_store %arg6[%150, %c0_36, %c0_37], %153 {strides = array<i32>} : memref<8x8x128xbf16, #tpu.memory_space<vmem>>, vector<1x8x128xbf16>,
    %c4_i32 = arith.constant 4 : i32
    %154 = arith.index_cast %c4_i32 : i32 to index
    %c0_38 = arith.constant 0 : index
    %c0_39 = arith.constant 0 : index
    %155 = vector.load %arg2[%154, %c0_38, %c0_39] : memref<8x8x512xbf16, #tpu.memory_space<vmem>>, vector<1x8x512xbf16>
    %156 = vector.shape_cast %155 : vector<1x8x512xbf16> to vector<8x512xbf16>
    %157 = arith.extf %156 : vector<8x512xbf16> to vector<8x512xf32>
    %158 = arith.truncf %148 : vector<8x128xf32> to vector<8x128xbf16>
    %cst_40 = arith.constant dense<0.000000e+00> : vector<8x512xf32>
    %159 = tpu.matmul %158, %3, %cst_40 {dimension_numbers = #tpu.dot_dimension_numbers<[1], [0], [0], [1], [0, 0, 1, 1], [], []>} : vector<8x128xbf16>, vector<128x512xbf16>, vector<8x512xf32> -> vector<8x512xf32>
    %160 = arith.addf %157, %159 : vector<8x512xf32>
    %161 = vector.extract_strided_slice %160 {offsets = [0, 0], sizes = [8, 128], strides = [1, 1]} : vector<8x512xf32> to vector<8x128xf32>
    %162 = arith.negf %161 : vector<8x128xf32>
    %163 = math.exp %162 : vector<8x128xf32>
    %cst_41 = arith.constant 1.000000e+00 : f32
    %164 = vector.broadcast %cst_41 : f32 to vector<8x128xf32>
    %165 = arith.addf %164, %163 : vector<8x128xf32>
    %166 = arith.divf %164, %165 : vector<8x128xf32>
    %167 = vector.extract_strided_slice %160 {offsets = [0, 128], sizes = [8, 128], strides = [1, 1]} : vector<8x512xf32> to vector<8x128xf32>
    %168 = arith.negf %167 : vector<8x128xf32>
    %169 = math.exp %168 : vector<8x128xf32>
    %cst_42 = arith.constant 1.000000e+00 : f32
    %170 = vector.broadcast %cst_42 : f32 to vector<8x128xf32>
    %171 = arith.addf %170, %169 : vector<8x128xf32>
    %172 = arith.divf %170, %171 : vector<8x128xf32>
    %173 = vector.extract_strided_slice %160 {offsets = [0, 256], sizes = [8, 128], strides = [1, 1]} : vector<8x512xf32> to vector<8x128xf32>
    %174 = arith.negf %173 : vector<8x128xf32>
    %175 = math.exp %174 : vector<8x128xf32>
    %cst_43 = arith.constant 1.000000e+00 : f32
    %176 = vector.broadcast %cst_43 : f32 to vector<8x128xf32>
    %177 = arith.addf %176, %175 : vector<8x128xf32>
    %178 = arith.divf %176, %177 : vector<8x128xf32>
    %179 = vector.extract_strided_slice %160 {offsets = [0, 384], sizes = [8, 128], strides = [1, 1]} : vector<8x512xf32> to vector<8x128xf32>
    %180 = math.tanh %179 : vector<8x128xf32>
    %181 = arith.mulf %172, %180 : vector<8x128xf32>
    %182 = arith.mulf %166, %146 : vector<8x128xf32>
    %183 = arith.addf %181, %182 : vector<8x128xf32>
    %184 = math.tanh %183 : vector<8x128xf32>
    %185 = arith.mulf %178, %184 : vector<8x128xf32>
    %186 = arith.truncf %185 : vector<8x128xf32> to vector<8x128xbf16>
    %187 = arith.index_cast %c4_i32 : i32 to index
    %c0_44 = arith.constant 0 : index
    %c0_45 = arith.constant 0 : index
    %188 = vector.load %arg6[%187, %c0_44, %c0_45] : memref<8x8x128xbf16, #tpu.memory_space<vmem>>, vector<1x8x128xbf16>
    %189 = vector.shape_cast %188 : vector<1x8x128xbf16> to vector<8x128xbf16>
    %190 = vector.shape_cast %186 : vector<8x128xbf16> to vector<1x8x128xbf16>
    tpu.vector_store %arg6[%187, %c0_44, %c0_45], %190 {strides = array<i32>} : memref<8x8x128xbf16, #tpu.memory_space<vmem>>, vector<1x8x128xbf16>,
    %c5_i32 = arith.constant 5 : i32
    %191 = arith.index_cast %c5_i32 : i32 to index
    %c0_46 = arith.constant 0 : index
    %c0_47 = arith.constant 0 : index
    %192 = vector.load %arg2[%191, %c0_46, %c0_47] : memref<8x8x512xbf16, #tpu.memory_space<vmem>>, vector<1x8x512xbf16>
    %193 = vector.shape_cast %192 : vector<1x8x512xbf16> to vector<8x512xbf16>
    %194 = arith.extf %193 : vector<8x512xbf16> to vector<8x512xf32>
    %195 = arith.truncf %185 : vector<8x128xf32> to vector<8x128xbf16>
    %cst_48 = arith.constant dense<0.000000e+00> : vector<8x512xf32>
    %196 = tpu.matmul %195, %3, %cst_48 {dimension_numbers = #tpu.dot_dimension_numbers<[1], [0], [0], [1], [0, 0, 1, 1], [], []>} : vector<8x128xbf16>, vector<128x512xbf16>, vector<8x512xf32> -> vector<8x512xf32>
    %197 = arith.addf %194, %196 : vector<8x512xf32>
    %198 = vector.extract_strided_slice %197 {offsets = [0, 0], sizes = [8, 128], strides = [1, 1]} : vector<8x512xf32> to vector<8x128xf32>
    %199 = arith.negf %198 : vector<8x128xf32>
    %200 = math.exp %199 : vector<8x128xf32>
    %cst_49 = arith.constant 1.000000e+00 : f32
    %201 = vector.broadcast %cst_49 : f32 to vector<8x128xf32>
    %202 = arith.addf %201, %200 : vector<8x128xf32>
    %203 = arith.divf %201, %202 : vector<8x128xf32>
    %204 = vector.extract_strided_slice %197 {offsets = [0, 128], sizes = [8, 128], strides = [1, 1]} : vector<8x512xf32> to vector<8x128xf32>
    %205 = arith.negf %204 : vector<8x128xf32>
    %206 = math.exp %205 : vector<8x128xf32>
    %cst_50 = arith.constant 1.000000e+00 : f32
    %207 = vector.broadcast %cst_50 : f32 to vector<8x128xf32>
    %208 = arith.addf %207, %206 : vector<8x128xf32>
    %209 = arith.divf %207, %208 : vector<8x128xf32>
    %210 = vector.extract_strided_slice %197 {offsets = [0, 256], sizes = [8, 128], strides = [1, 1]} : vector<8x512xf32> to vector<8x128xf32>
    %211 = arith.negf %210 : vector<8x128xf32>
    %212 = math.exp %211 : vector<8x128xf32>
    %cst_51 = arith.constant 1.000000e+00 : f32
    %213 = vector.broadcast %cst_51 : f32 to vector<8x128xf32>
    %214 = arith.addf %213, %212 : vector<8x128xf32>
    %215 = arith.divf %213, %214 : vector<8x128xf32>
    %216 = vector.extract_strided_slice %197 {offsets = [0, 384], sizes = [8, 128], strides = [1, 1]} : vector<8x512xf32> to vector<8x128xf32>
    %217 = math.tanh %216 : vector<8x128xf32>
    %218 = arith.mulf %209, %217 : vector<8x128xf32>
    %219 = arith.mulf %203, %183 : vector<8x128xf32>
    %220 = arith.addf %218, %219 : vector<8x128xf32>
    %221 = math.tanh %220 : vector<8x128xf32>
    %222 = arith.mulf %215, %221 : vector<8x128xf32>
    %223 = arith.truncf %222 : vector<8x128xf32> to vector<8x128xbf16>
    %224 = arith.index_cast %c5_i32 : i32 to index
    %c0_52 = arith.constant 0 : index
    %c0_53 = arith.constant 0 : index
    %225 = vector.load %arg6[%224, %c0_52, %c0_53] : memref<8x8x128xbf16, #tpu.memory_space<vmem>>, vector<1x8x128xbf16>
    %226 = vector.shape_cast %225 : vector<1x8x128xbf16> to vector<8x128xbf16>
    %227 = vector.shape_cast %223 : vector<8x128xbf16> to vector<1x8x128xbf16>
    tpu.vector_store %arg6[%224, %c0_52, %c0_53], %227 {strides = array<i32>} : memref<8x8x128xbf16, #tpu.memory_space<vmem>>, vector<1x8x128xbf16>,
    %c6_i32 = arith.constant 6 : i32
    %228 = arith.index_cast %c6_i32 : i32 to index
    %c0_54 = arith.constant 0 : index
    %c0_55 = arith.constant 0 : index
    %229 = vector.load %arg2[%228, %c0_54, %c0_55] : memref<8x8x512xbf16, #tpu.memory_space<vmem>>, vector<1x8x512xbf16>
    %230 = vector.shape_cast %229 : vector<1x8x512xbf16> to vector<8x512xbf16>
    %231 = arith.extf %230 : vector<8x512xbf16> to vector<8x512xf32>
    %232 = arith.truncf %222 : vector<8x128xf32> to vector<8x128xbf16>
    %cst_56 = arith.constant dense<0.000000e+00> : vector<8x512xf32>
    %233 = tpu.matmul %232, %3, %cst_56 {dimension_numbers = #tpu.dot_dimension_numbers<[1], [0], [0], [1], [0, 0, 1, 1], [], []>} : vector<8x128xbf16>, vector<128x512xbf16>, vector<8x512xf32> -> vector<8x512xf32>
    %234 = arith.addf %231, %233 : vector<8x512xf32>
    %235 = vector.extract_strided_slice %234 {offsets = [0, 0], sizes = [8, 128], strides = [1, 1]} : vector<8x512xf32> to vector<8x128xf32>
    %236 = arith.negf %235 : vector<8x128xf32>
    %237 = math.exp %236 : vector<8x128xf32>
    %cst_57 = arith.constant 1.000000e+00 : f32
    %238 = vector.broadcast %cst_57 : f32 to vector<8x128xf32>
    %239 = arith.addf %238, %237 : vector<8x128xf32>
    %240 = arith.divf %238, %239 : vector<8x128xf32>
    %241 = vector.extract_strided_slice %234 {offsets = [0, 128], sizes = [8, 128], strides = [1, 1]} : vector<8x512xf32> to vector<8x128xf32>
    %242 = arith.negf %241 : vector<8x128xf32>
    %243 = math.exp %242 : vector<8x128xf32>
    %cst_58 = arith.constant 1.000000e+00 : f32
    %244 = vector.broadcast %cst_58 : f32 to vector<8x128xf32>
    %245 = arith.addf %244, %243 : vector<8x128xf32>
    %246 = arith.divf %244, %245 : vector<8x128xf32>
    %247 = vector.extract_strided_slice %234 {offsets = [0, 256], sizes = [8, 128], strides = [1, 1]} : vector<8x512xf32> to vector<8x128xf32>
    %248 = arith.negf %247 : vector<8x128xf32>
    %249 = math.exp %248 : vector<8x128xf32>
    %cst_59 = arith.constant 1.000000e+00 : f32
    %250 = vector.broadcast %cst_59 : f32 to vector<8x128xf32>
    %251 = arith.addf %250, %249 : vector<8x128xf32>
    %252 = arith.divf %250, %251 : vector<8x128xf32>
    %253 = vector.extract_strided_slice %234 {offsets = [0, 384], sizes = [8, 128], strides = [1, 1]} : vector<8x512xf32> to vector<8x128xf32>
    %254 = math.tanh %253 : vector<8x128xf32>
    %255 = arith.mulf %246, %254 : vector<8x128xf32>
    %256 = arith.mulf %240, %220 : vector<8x128xf32>
    %257 = arith.addf %255, %256 : vector<8x128xf32>
    %258 = math.tanh %257 : vector<8x128xf32>
    %259 = arith.mulf %252, %258 : vector<8x128xf32>
    %260 = arith.truncf %259 : vector<8x128xf32> to vector<8x128xbf16>
    %261 = arith.index_cast %c6_i32 : i32 to index
    %c0_60 = arith.constant 0 : index
    %c0_61 = arith.constant 0 : index
    %262 = vector.load %arg6[%261, %c0_60, %c0_61] : memref<8x8x128xbf16, #tpu.memory_space<vmem>>, vector<1x8x128xbf16>
    %263 = vector.shape_cast %262 : vector<1x8x128xbf16> to vector<8x128xbf16>
    %264 = vector.shape_cast %260 : vector<8x128xbf16> to vector<1x8x128xbf16>
    tpu.vector_store %arg6[%261, %c0_60, %c0_61], %264 {strides = array<i32>} : memref<8x8x128xbf16, #tpu.memory_space<vmem>>, vector<1x8x128xbf16>,
    %c7_i32 = arith.constant 7 : i32
    %265 = arith.index_cast %c7_i32 : i32 to index
    %c0_62 = arith.constant 0 : index
    %c0_63 = arith.constant 0 : index
    %266 = vector.load %arg2[%265, %c0_62, %c0_63] : memref<8x8x512xbf16, #tpu.memory_space<vmem>>, vector<1x8x512xbf16>
    %267 = vector.shape_cast %266 : vector<1x8x512xbf16> to vector<8x512xbf16>
    %268 = arith.extf %267 : vector<8x512xbf16> to vector<8x512xf32>
    %269 = arith.truncf %259 : vector<8x128xf32> to vector<8x128xbf16>
    %cst_64 = arith.constant dense<0.000000e+00> : vector<8x512xf32>
    %270 = tpu.matmul %269, %3, %cst_64 {dimension_numbers = #tpu.dot_dimension_numbers<[1], [0], [0], [1], [0, 0, 1, 1], [], []>} : vector<8x128xbf16>, vector<128x512xbf16>, vector<8x512xf32> -> vector<8x512xf32>
    %271 = arith.addf %268, %270 : vector<8x512xf32>
    %272 = vector.extract_strided_slice %271 {offsets = [0, 0], sizes = [8, 128], strides = [1, 1]} : vector<8x512xf32> to vector<8x128xf32>
    %273 = arith.negf %272 : vector<8x128xf32>
    %274 = math.exp %273 : vector<8x128xf32>
    %cst_65 = arith.constant 1.000000e+00 : f32
    %275 = vector.broadcast %cst_65 : f32 to vector<8x128xf32>
    %276 = arith.addf %275, %274 : vector<8x128xf32>
    %277 = arith.divf %275, %276 : vector<8x128xf32>
    %278 = vector.extract_strided_slice %271 {offsets = [0, 128], sizes = [8, 128], strides = [1, 1]} : vector<8x512xf32> to vector<8x128xf32>
    %279 = arith.negf %278 : vector<8x128xf32>
    %280 = math.exp %279 : vector<8x128xf32>
    %cst_66 = arith.constant 1.000000e+00 : f32
    %281 = vector.broadcast %cst_66 : f32 to vector<8x128xf32>
    %282 = arith.addf %281, %280 : vector<8x128xf32>
    %283 = arith.divf %281, %282 : vector<8x128xf32>
    %284 = vector.extract_strided_slice %271 {offsets = [0, 256], sizes = [8, 128], strides = [1, 1]} : vector<8x512xf32> to vector<8x128xf32>
    %285 = arith.negf %284 : vector<8x128xf32>
    %286 = math.exp %285 : vector<8x128xf32>
    %cst_67 = arith.constant 1.000000e+00 : f32
    %287 = vector.broadcast %cst_67 : f32 to vector<8x128xf32>
    %288 = arith.addf %287, %286 : vector<8x128xf32>
    %289 = arith.divf %287, %288 : vector<8x128xf32>
    %290 = vector.extract_strided_slice %271 {offsets = [0, 384], sizes = [8, 128], strides = [1, 1]} : vector<8x512xf32> to vector<8x128xf32>
    %291 = math.tanh %290 : vector<8x128xf32>
    %292 = arith.mulf %283, %291 : vector<8x128xf32>
    %293 = arith.mulf %277, %257 : vector<8x128xf32>
    %294 = arith.addf %292, %293 : vector<8x128xf32>
    %295 = math.tanh %294 : vector<8x128xf32>
    %296 = arith.mulf %289, %295 : vector<8x128xf32>
    %297 = arith.truncf %296 : vector<8x128xf32> to vector<8x128xbf16>
    %298 = arith.index_cast %c7_i32 : i32 to index
    %c0_68 = arith.constant 0 : index
    %c0_69 = arith.constant 0 : index
    %299 = vector.load %arg6[%298, %c0_68, %c0_69] : memref<8x8x128xbf16, #tpu.memory_space<vmem>>, vector<1x8x128xbf16>
    %300 = vector.shape_cast %299 : vector<1x8x128xbf16> to vector<8x128xbf16>
    %301 = vector.shape_cast %297 : vector<8x128xbf16> to vector<1x8x128xbf16>
    tpu.vector_store %arg6[%298, %c0_68, %c0_69], %301 {strides = array<i32>} : memref<8x8x128xbf16, #tpu.memory_space<vmem>>, vector<1x8x128xbf16>,
    %c8_i32 = arith.constant 8 : i32
    %c0_70 = arith.constant 0 : index
    %c0_71 = arith.constant 0 : index
    %302 = vector.load %arg9[%c0_70, %c0_71] : memref<8x128xf32, #tpu.memory_space<vmem>>, vector<8x128xf32>
    tpu.vector_store %arg9[%c0_70, %c0_71], %296 {strides = array<i32>} : memref<8x128xf32, #tpu.memory_space<vmem>>, vector<8x128xf32>,
    %c0_72 = arith.constant 0 : index
    %c0_73 = arith.constant 0 : index
    %303 = vector.load %arg10[%c0_72, %c0_73] : memref<8x128xf32, #tpu.memory_space<vmem>>, vector<8x128xf32>
    tpu.vector_store %arg10[%c0_72, %c0_73], %294 {strides = array<i32>} : memref<8x128xf32, #tpu.memory_space<vmem>>, vector<8x128xf32>,
    %c0_i32_74 = arith.constant 0 : i32
    %304 = arith.cmpi eq, %arg1, %c0_i32_74 : i32
    %305 = arith.extui %304 : i1 to i32
    %c0_i32_75 = arith.constant 0 : i32
    %306 = arith.cmpi ne, %305, %c0_i32_75 : i32
    scf.if %306 {
      %c0_76 = arith.constant 0 : index
      %c0_77 = arith.constant 0 : index
      %307 = vector.load %arg9[%c0_76, %c0_77] : memref<8x128xf32, #tpu.memory_space<vmem>>, vector<8x128xf32>
      %c0_78 = arith.constant 0 : index
      %c0_79 = arith.constant 0 : index
      %308 = vector.load %arg7[%c0_78, %c0_79] : memref<8x128xf32, #tpu.memory_space<vmem>>, vector<8x128xf32>
      tpu.vector_store %arg7[%c0_78, %c0_79], %307 {strides = array<i32>} : memref<8x128xf32, #tpu.memory_space<vmem>>, vector<8x128xf32>,
      %c0_80 = arith.constant 0 : index
      %c0_81 = arith.constant 0 : index
      %309 = vector.load %arg10[%c0_80, %c0_81] : memref<8x128xf32, #tpu.memory_space<vmem>>, vector<8x128xf32>
      %c0_82 = arith.constant 0 : index
      %c0_83 = arith.constant 0 : index
      %310 = vector.load %arg8[%c0_82, %c0_83] : memref<8x128xf32, #tpu.memory_space<vmem>>, vector<8x128xf32>
      tpu.vector_store %arg8[%c0_82, %c0_83], %309 {strides = array<i32>} : memref<8x128xf32, #tpu.memory_space<vmem>>, vector<8x128xf32>,
    } else {
    }
    return
  }
  func.func @transform_0(%arg0: i32, %arg1: i32) -> (i32, i32, i32) {
    %c0_i32 = arith.constant 0 : i32
    %c0_i32_0 = arith.constant 0 : i32
    return %arg1, %arg0, %c0_i32 : i32, i32, i32
  }
  func.func @transform_1(%arg0: i32, %arg1: i32) -> (i32, i32) {
    %c0_i32 = arith.constant 0 : i32
    %c0_i32_0 = arith.constant 0 : i32
    %c0_i32_1 = arith.constant 0 : i32
    return %c0_i32, %c0_i32_0 : i32, i32
  }
  func.func @transform_2(%arg0: i32, %arg1: i32) -> (i32, i32) {
    %c0_i32 = arith.constant 0 : i32
    %c0_i32_0 = arith.constant 0 : i32
    return %arg0, %c0_i32 : i32, i32
  }
  func.func @transform_3(%arg0: i32, %arg1: i32) -> (i32, i32) {
    %c0_i32 = arith.constant 0 : i32
    %c0_i32_0 = arith.constant 0 : i32
    return %arg0, %c0_i32 : i32, i32
  }
  func.func @transform_4(%arg0: i32, %arg1: i32) -> (i32, i32, i32) {
    %c0_i32 = arith.constant 0 : i32
    %c0_i32_0 = arith.constant 0 : i32
    return %arg1, %arg0, %c0_i32 : i32, i32, i32
  }
  func.func @transform_5(%arg0: i32, %arg1: i32) -> (i32, i32) {
    %c0_i32 = arith.constant 0 : i32
    %c0_i32_0 = arith.constant 0 : i32
    return %arg0, %c0_i32 : i32, i32
  }
  func.func @transform_6(%arg0: i32, %arg1: i32) -> (i32, i32) {
    %c0_i32 = arith.constant 0 : i32
    %c0_i32_0 = arith.constant 0 : i32
    return %arg0, %c0_i32 : i32, i32
  }
}

</mosaic_0001>

<llo_original>
// kernel: lstm_frame_forward.2
$region0: #{lstm_frame_forward.2}
  #allocation0 [shape = 'u32[]', space=smem, size = 0x4, offset = 0x4, fixed_abs, tag = 'smem constant byte address 0x4 - core index']
  #allocation1 [shape = 'u32[144,128]{1,0:T(1,128)}', space=vmem, size = 0x12000, scoped, tag = 'internal scratch']
  #allocation2 [shape = 'f32[8,128]{1,0:T(8,128)}', space=vmem, size = 0x1000, scoped, tag = 'scratch operand']
  #allocation3 [shape = 'f32[8,128]{1,0:T(8,128)}', space=vmem, size = 0x1000, scoped, tag = 'scratch operand']
  %s0 = inlined_call_operand.vmem [shape: bf16[8,8,512], index: 0, kind: input, shape index: {}]
  %s1 = inlined_call_operand.vmem [shape: bf16[128,512], index: 1, kind: input, shape index: {}]
  %s2 = inlined_call_operand.vmem [shape: f32[8,128], index: 2, kind: input, shape index: {}, may-alias: {2,3}]
  %s3 = inlined_call_operand.vmem [shape: f32[8,128], index: 3, kind: input, shape index: {}, may-alias: {2,3}]
  %s4 = inlined_call_operand.vmem [shape: bf16[8,8,128], index: 4, kind: output, shape index: {0}]
  %s5 = inlined_call_operand.vmem [shape: f32[8,128], index: 5, kind: output, shape index: {1}]
  %s6 = inlined_call_operand.vmem [shape: f32[8,128], index: 6, kind: output, shape index: {2}]
  %7 = xla_tuple %s4, %s5, %s6
  %s8 = sld [smem:[#allocation0]]
  $region50: #{lstm_frame_forward.2} parent=0
    _
  %s10 = ssub.s32 1, %s8
  %s11 = scalar_select 0, %s10, %s8
  // Predicated region
  $region2: #{lstm_frame_forward.2} parent=0 // pred_check
    _
  $region3: #{lstm_frame_forward.2} parent=0 // pred_check_branch
    %13 = sbr.rel (0) target = $region5
  $region4: #{lstm_frame_forward.2} parent=0 // pred_region
    _
  $region5: #{lstm_frame_forward.2} parent=0 // pred_fallthru
    _
  // Predicated region
  $region6: #{lstm_frame_forward.2} parent=0 // pred_check
    _
  $region7: #{lstm_frame_forward.2} parent=0 // pred_check_branch
    %15 = sbr.rel (0) target = $region9
  $region8: #{lstm_frame_forward.2} parent=0 // pred_region
    _
  $region9: #{lstm_frame_forward.2} parent=0 // pred_fallthru
    _
  // Predicated region
  $region10: #{lstm_frame_forward.2} parent=0 // pred_check
    _
  $region11: #{lstm_frame_forward.2} parent=0 // pred_check_branch
    %17 = sbr.rel (0) target = $region13
  $region12: #{lstm_frame_forward.2} parent=0 // pred_region
    _
  $region13: #{lstm_frame_forward.2} parent=0 // pred_fallthru
    _
  // Predicated region
  $region14: #{lstm_frame_forward.2} parent=0 // pred_check
    _
  $region15: #{lstm_frame_forward.2} parent=0 // pred_check_branch
    %19 = sbr.rel (0) target = $region17
  $region16: #{lstm_frame_forward.2} parent=0 // pred_region
    _
  $region17: #{lstm_frame_forward.2} parent=0 // pred_fallthru
    _
  %p21 = scmp.eq.s32.totalorder 0, 0
  // Predicated region
  $region18: #{lstm_frame_forward.2} parent=0 // pred_check
    %p22 = pneg %p21
  $region19: #{lstm_frame_forward.2} parent=0 // pred_check_branch
    %24 = sbr.rel (%p22) target = $region21
  $region20: #{lstm_frame_forward.2} parent=0 // pred_region
    %v25 = vld [vmem:[%s2] sm:$0xff]
    %26 = vst [vmem:[#allocation2] sm:$0xff] %v25
    %v27 = vld [vmem:[%s3] sm:$0xff]
    %28 = vst [vmem:[#allocation3] sm:$0xff] %v27
  $region21: #{lstm_frame_forward.2} parent=0 // pred_fallthru
    _
  %v29 = vld [vmem:[%s1] sm:$0xff]
  %v30 = vld [vmem:[%s1 + $0x8] sm:$0xff]
  %v31 = vld [vmem:[%s1 + $0x10] sm:$0xff]
  %v32 = vld [vmem:[%s1 + $0x18] sm:$0xff]
  %v33 = vld [vmem:[%s1 + $0x20] sm:$0xff]
  %v34 = vld [vmem:[%s1 + $0x28] sm:$0xff]
  %v35 = vld [vmem:[%s1 + $0x30] sm:$0xff]
  %v36 = vld [vmem:[%s1 + $0x38] sm:$0xff]
  %v37 = vld [vmem:[%s1 + $0x40] sm:$0xff]
  %v38 = vld [vmem:[%s1 + $0x48] sm:$0xff]
  %v39 = vld [vmem:[%s1 + $0x50] sm:$0xff]
  %v40 = vld [vmem:[%s1 + $0x58] sm:$0xff]
  %v41 = vld [vmem:[%s1 + $0x60] sm:$0xff]
  %v42 = vld [vmem:[%s1 + $0x68] sm:$0xff]
  %v43 = vld [vmem:[%s1 + $0x70] sm:$0xff]
  %v44 = vld [vmem:[%s1 + $0x78] sm:$0xff]
  %v45 = vld [vmem:[%s1 + $0x80] sm:$0xff]
  %v46 = vld [vmem:[%s1 + $0x88] sm:$0xff]
  %v47 = vld [vmem:[%s1 + $0x90] sm:$0xff]
  %v48 = vld [vmem:[%s1 + $0x98] sm:$0xff]
  %v49 = vld [vmem:[%s1 + $0xa0] sm:$0xff]
  %v50 = vld [vmem:[%s1 + $0xa8] sm:$0xff]
  %v51 = vld [vmem:[%s1 + $0xb0] sm:$0xff]
  %v52 = vld [vmem:[%s1 + $0xb8] sm:$0xff]
  %v53 = vld [vmem:[%s1 + $0xc0] sm:$0xff]
  %v54 = vld [vmem:[%s1 + $0xc8] sm:$0xff]
  %v55 = vld [vmem:[%s1 + $0xd0] sm:$0xff]
  %v56 = vld [vmem:[%s1 + $0xd8] sm:$0xff]
  %v57 = vld [vmem:[%s1 + $0xe0] sm:$0xff]
  %v58 = vld [vmem:[%s1 + $0xe8] sm:$0xff]
  %v59 = vld [vmem:[%s1 + $0xf0] sm:$0xff]
  %v60 = vld [vmem:[%s1 + $0xf8] sm:$0xff]
  %v61 = vld [vmem:[#allocation2] sm:$0xff]
  %v62 = vld [vmem:[#allocation3] sm:$0xff]
  %v63 = vld [vmem:[%s0] sm:$0xff]
  %v64 = vld [vmem:[%s0 + $0x8] sm:$0xff]
  %v65 = vunpack.c.l.bf16 %v63
  %v66 = vunpack.c.h.bf16 %v63
  %v67 = vunpack.c.l.bf16 %v64
  %v68 = vunpack.c.h.bf16 %v64
  %v69 = vpack.c.bf16 %v61, %v61
  %v102 = vunpack.c.l.b16 %v29
  %v103 = vunpack.c.h.b16 %v29
  %v104 = vunpack.c.l.b16 %v30
  %v105 = vunpack.c.h.b16 %v30
  %v106 = vunpack.c.l.b16 %v31
  %v107 = vunpack.c.h.b16 %v31
  %v108 = vunpack.c.l.b16 %v32
  %v109 = vunpack.c.h.b16 %v32
  %v110 = vunpack.c.l.b16 %v33
  %v111 = vunpack.c.h.b16 %v33
  %v112 = vunpack.c.l.b16 %v34
  %v113 = vunpack.c.h.b16 %v34
  %v114 = vunpack.c.l.b16 %v35
  %v115 = vunpack.c.h.b16 %v35
  %v116 = vunpack.c.l.b16 %v36
  %v117 = vunpack.c.h.b16 %v36
  %v118 = vunpack.c.l.b16 %v37
  %v119 = vunpack.c.h.b16 %v37
  %v120 = vunpack.c.l.b16 %v38
  %v121 = vunpack.c.h.b16 %v38
  %v122 = vunpack.c.l.b16 %v39
  %v123 = vunpack.c.h.b16 %v39
  %v124 = vunpack.c.l.b16 %v40
  %v125 = vunpack.c.h.b16 %v40
  %v126 = vunpack.c.l.b16 %v41
  %v127 = vunpack.c.h.b16 %v41
  %v128 = vunpack.c.l.b16 %v42
  %v129 = vunpack.c.h.b16 %v42
  %v130 = vunpack.c.l.b16 %v43
  %v131 = vunpack.c.h.b16 %v43
  %v132 = vunpack.c.l.b16 %v44
  %v133 = vunpack.c.h.b16 %v44
  %v134 = vunpack.c.l.b16 %v45
  %v135 = vunpack.c.h.b16 %v45
  %v136 = vunpack.c.l.b16 %v46
  %v137 = vunpack.c.h.b16 %v46
  %v138 = vunpack.c.l.b16 %v47
  %v139 = vunpack.c.h.b16 %v47
  %v140 = vunpack.c.l.b16 %v48
  %v141 = vunpack.c.h.b16 %v48
  %v142 = vunpack.c.l.b16 %v49
  %v143 = vunpack.c.h.b16 %v49
  %v144 = vunpack.c.l.b16 %v50
  %v145 = vunpack.c.h.b16 %v50
  %v146 = vunpack.c.l.b16 %v51
  %v147 = vunpack.c.h.b16 %v51
  %v148 = vunpack.c.l.b16 %v52
  %v149 = vunpack.c.h.b16 %v52
  %v150 = vunpack.c.l.b16 %v53
  %v151 = vunpack.c.h.b16 %v53
  %v152 = vunpack.c.l.b16 %v54
  %v153 = vunpack.c.h.b16 %v54
  %v154 = vunpack.c.l.b16 %v55
  %v155 = vunpack.c.h.b16 %v55
  %v156 = vunpack.c.l.b16 %v56
  %v157 = vunpack.c.h.b16 %v56
  %v158 = vunpack.c.l.b16 %v57
  %v159 = vunpack.c.h.b16 %v57
  %v160 = vunpack.c.l.b16 %v58
  %v161 = vunpack.c.h.b16 %v58
  %v162 = vunpack.c.l.b16 %v59
  %v163 = vunpack.c.h.b16 %v59
  %v164 = vunpack.c.l.b16 %v60
  %v165 = vunpack.c.h.b16 %v60
  %v166 = vpack.c.b16 %v106, %v102
  %v167 = vpack.c.b16 %v107, %v103
  %v168 = vpack.c.b16 %v108, %v104
  %v169 = vpack.c.b16 %v109, %v105
  %v170 = vpack.c.b16 %v114, %v110
  %v171 = vpack.c.b16 %v115, %v111
  %v172 = vpack.c.b16 %v116, %v112
  %v173 = vpack.c.b16 %v117, %v113
  %v174 = vpack.c.b16 %v122, %v118
  %v175 = vpack.c.b16 %v123, %v119
  %v176 = vpack.c.b16 %v124, %v120
  %v177 = vpack.c.b16 %v125, %v121
  %v178 = vpack.c.b16 %v130, %v126
  %v179 = vpack.c.b16 %v131, %v127
  %v180 = vpack.c.b16 %v132, %v128
  %v181 = vpack.c.b16 %v133, %v129
  %v182 = vpack.c.b16 %v138, %v134
  %v183 = vpack.c.b16 %v139, %v135
  %v184 = vpack.c.b16 %v140, %v136
  %v185 = vpack.c.b16 %v141, %v137
  %v186 = vpack.c.b16 %v146, %v142
  %v187 = vpack.c.b16 %v147, %v143
  %v188 = vpack.c.b16 %v148, %v144
  %v189 = vpack.c.b16 %v149, %v145
  %v190 = vpack.c.b16 %v154, %v150
  %v191 = vpack.c.b16 %v155, %v151
  %v192 = vpack.c.b16 %v156, %v152
  %v193 = vpack.c.b16 %v157, %v153
  %v194 = vpack.c.b16 %v162, %v158
  %v195 = vpack.c.b16 %v163, %v159
  %v196 = vpack.c.b16 %v164, %v160
  %v197 = vpack.c.b16 %v165, %v161
  %230 = vmatprep.subr.bf16.mxu0 %v167
  %231 = vmatpush1.bf16.msra.mxu0 %v166
  %232 = vmatprep.subr.bf16.mxu0 %v171
  %233 = vmatpush1.bf16.msra.mxu0 %v170
  %234 = vmatprep.subr.bf16.mxu0 %v175
  %235 = vmatpush1.bf16.msra.mxu0 %v174
  %236 = vmatprep.subr.bf16.mxu0 %v179
  %237 = vmatpush1.bf16.msra.mxu0 %v178
  %238 = vmatprep.subr.bf16.mxu0 %v183
  %239 = vmatpush1.bf16.msra.mxu0 %v182
  %240 = vmatprep.subr.bf16.mxu0 %v187
  %241 = vmatpush1.bf16.msra.mxu0 %v186
  %242 = vmatprep.subr.bf16.mxu0 %v191
  %243 = vmatpush1.bf16.msra.mxu0 %v190
  %244 = vmatprep.subr.bf16.mxu0 %v195
  %245 = vmatpush1.bf16.msra.mxu0 %v194
  %246 = vmatprep.subr.bf16.mxu0 0
  %247 = vmatpush1.bf16.msra.mxu0 0
  %248 = vmatprep.subr.bf16.mxu0 0
  %249 = vmatpush1.bf16.msra.mxu0 0
  %250 = vmatprep.subr.bf16.mxu0 0
  %251 = vmatpush1.bf16.msra.mxu0 0
  %252 = vmatprep.subr.bf16.mxu0 0
  %253 = vmatpush1.bf16.msra.mxu0 0
  %254 = vmatprep.subr.bf16.mxu0 0
  %255 = vmatpush1.bf16.msra.mxu0 0
  %256 = vmatprep.subr.bf16.mxu0 0
  %257 = vmatpush1.bf16.msra.mxu0 0
  %258 = vmatprep.subr.bf16.mxu0 0
  %259 = vmatpush1.bf16.msra.mxu0 0
  %260 = vmatprep.subr.bf16.mxu0 0
  %261 = vmatpush1.bf16.msra.mxu0 0
  %262 = vmatprep.mubr.bf16.mxu0 0
  %263 = vmatmul.mubr.bf16.gmra.mrb[0].mxu0 %v69
  %v264 = vpop.f32.mrb[0].mxu0
  %v265 = vadd.f32 0.0, %v264
  %v266 = vpop.f32.mrb[0].mxu0
  %v267 = vadd.f32 0.0, %v266
  %v268 = vpop.f32.mrb[0].mxu0
  %v269 = vpop.f32.mrb[0].mxu0
  %270 = vdwg.mxu0
  %271 = vmatprep.subr.bf16.mxu0 %v169
  %272 = vmatpush1.bf16.msra.mxu0 %v168
  %273 = vmatprep.subr.bf16.mxu0 %v173
  %274 = vmatpush1.bf16.msra.mxu0 %v172
  %275 = vmatprep.subr.bf16.mxu0 %v177
  %276 = vmatpush1.bf16.msra.mxu0 %v176
  %277 = vmatprep.subr.bf16.mxu0 %v181
  %278 = vmatpush1.bf16.msra.mxu0 %v180
  %279 = vmatprep.subr.bf16.mxu0 %v185
  %280 = vmatpush1.bf16.msra.mxu0 %v184
  %281 = vmatprep.subr.bf16.mxu0 %v189
  %282 = vmatpush1.bf16.msra.mxu0 %v188
  %283 = vmatprep.subr.bf16.mxu0 %v193
  %284 = vmatpush1.bf16.msra.mxu0 %v192
  %285 = vmatprep.subr.bf16.mxu0 %v197
  %286 = vmatpush1.bf16.msra.mxu0 %v196
  %287 = vmatprep.subr.bf16.mxu0 0
  %288 = vmatpush1.bf16.msra.mxu0 0
  %289 = vmatprep.subr.bf16.mxu0 0
  %290 = vmatpush1.bf16.msra.mxu0 0
  %291 = vmatprep.subr.bf16.mxu0 0
  %292 = vmatpush1.bf16.msra.mxu0 0
  %293 = vmatprep.subr.bf16.mxu0 0
  %294 = vmatpush1.bf16.msra.mxu0 0
  %295 = vmatprep.subr.bf16.mxu0 0
  %296 = vmatpush1.bf16.msra.mxu0 0
  %297 = vmatprep.subr.bf16.mxu0 0
  %298 = vmatpush1.bf16.msra.mxu0 0
  %299 = vmatprep.subr.bf16.mxu0 0
  %300 = vmatpush1.bf16.msra.mxu0 0
  %301 = vmatprep.subr.bf16.mxu0 0
  %302 = vmatpush1.bf16.msra.mxu0 0
  %303 = vmatprep.mubr.bf16.mxu0 0
  %304 = vmatmul.mubr.bf16.gmra.mrb[0].mxu0 %v69
  %v305 = vpop.f32.mrb[0].mxu0
  %v306 = vadd.f32 0.0, %v305
  %v307 = vpop.f32.mrb[0].mxu0
  %v308 = vadd.f32 0.0, %v307
  %v309 = vpop.f32.mrb[0].mxu0
  %v310 = vpop.f32.mrb[0].mxu0
  %311 = vdwg.mxu0
  %v312 = vadd.f32 %v65, %v265
  %v313 = vadd.f32 %v66, %v267
  %v314 = vadd.f32 %v67, %v306
  %v315 = vadd.f32 %v68, %v308
  %v316 = vxor.u32 %v312, 2147483648
  %v317 = vmul.f32 %v316, 1.442695
  %v318 = vpow.pop %v317
  %v319 = vadd.f32 %v318, 1.0
  %v320 = vrcp.pop %v319
  %v321 = vmul.f32 1.0, %v320
  %v322 = vxor.u32 %v313, 2147483648
  %v323 = vmul.f32 %v322, 1.442695
  %v324 = vpow.pop %v323
  %v325 = vadd.f32 %v324, 1.0
  %v326 = vrcp.pop %v325
  %v327 = vmul.f32 1.0, %v326
  %v328 = vxor.u32 %v314, 2147483648
  %v329 = vmul.f32 %v328, 1.442695
  %v330 = vpow.pop %v329
  %v331 = vadd.f32 %v330, 1.0
  %v332 = vrcp.pop %v331
  %v333 = vmul.f32 1.0, %v332
  %v334 = vtanh.pop %v315
  %v335 = vmul.f32 %v327, %v334
  %v336 = vmul.f32 %v321, %v62
  %v337 = vadd.f32 %v335, %v336
  %v338 = vtanh.pop %v337
  %v339 = vmul.f32 %v333, %v338
  %v340 = vpack.c.bf16 %v339, %v339
  %341 = vst [vmem:[%s4] sm:$0xf] %v340
  %s342 = scalar_lea.vmem %s0, 16
  %v343 = vld [vmem:[%s342] sm:$0xff]
  %v344 = vld [vmem:[%s342 + $0x8] sm:$0xff]
  %v345 = vunpack.c.l.bf16 %v343
  %v346 = vunpack.c.h.bf16 %v343
  %v347 = vunpack.c.l.bf16 %v344
  %v348 = vunpack.c.h.bf16 %v344
  %349 = vmatprep.subr.bf16.mxu0 %v167
  %350 = vmatpush1.bf16.msra.mxu0 %v166
  %351 = vmatprep.subr.bf16.mxu0 %v171
  %352 = vmatpush1.bf16.msra.mxu0 %v170
  %353 = vmatprep.subr.bf16.mxu0 %v175
  %354 = vmatpush1.bf16.msra.mxu0 %v174
  %355 = vmatprep.subr.bf16.mxu0 %v179
  %356 = vmatpush1.bf16.msra.mxu0 %v178
  %357 = vmatprep.subr.bf16.mxu0 %v183
  %358 = vmatpush1.bf16.msra.mxu0 %v182
  %359 = vmatprep.subr.bf16.mxu0 %v187
  %360 = vmatpush1.bf16.msra.mxu0 %v186
  %361 = vmatprep.subr.bf16.mxu0 %v191
  %362 = vmatpush1.bf16.msra.mxu0 %v190
  %363 = vmatprep.subr.bf16.mxu0 %v195
  %364 = vmatpush1.bf16.msra.mxu0 %v194
  %365 = vmatprep.subr.bf16.mxu0 0
  %366 = vmatpush1.bf16.msra.mxu0 0
  %367 = vmatprep.subr.bf16.mxu0 0
  %368 = vmatpush1.bf16.msra.mxu0 0
  %369 = vmatprep.subr.bf16.mxu0 0
  %370 = vmatpush1.bf16.msra.mxu0 0
  %371 = vmatprep.subr.bf16.mxu0 0
  %372 = vmatpush1.bf16.msra.mxu0 0
  %373 = vmatprep.subr.bf16.mxu0 0
  %374 = vmatpush1.bf16.msra.mxu0 0
  %375 = vmatprep.subr.bf16.mxu0 0
  %376 = vmatpush1.bf16.msra.mxu0 0
  %377 = vmatprep.subr.bf16.mxu0 0
  %378 = vmatpush1.bf16.msra.mxu0 0
  %379 = vmatprep.subr.bf16.mxu0 0
  %380 = vmatpush1.bf16.msra.mxu0 0
  %381 = vmatprep.mubr.bf16.mxu0 0
  %382 = vmatmul.mubr.bf16.gmra.mrb[0].mxu0 %v340
  %v383 = vpop.f32.mrb[0].mxu0
  %v384 = vadd.f32 0.0, %v383
  %v385 = vpop.f32.mrb[0].mxu0
  %v386 = vadd.f32 0.0, %v385
  %v387 = vpop.f32.mrb[0].mxu0
  %v388 = vpop.f32.mrb[0].mxu0
  %389 = vdwg.mxu0
  %390 = vmatprep.subr.bf16.mxu0 %v169
  %391 = vmatpush1.bf16.msra.mxu0 %v168
  %392 = vmatprep.subr.bf16.mxu0 %v173
  %393 = vmatpush1.bf16.msra.mxu0 %v172
  %394 = vmatprep.subr.bf16.mxu0 %v177
  %395 = vmatpush1.bf16.msra.mxu0 %v176
  %396 = vmatprep.subr.bf16.mxu0 %v181
  %397 = vmatpush1.bf16.msra.mxu0 %v180
  %398 = vmatprep.subr.bf16.mxu0 %v185
  %399 = vmatpush1.bf16.msra.mxu0 %v184
  %400 = vmatprep.subr.bf16.mxu0 %v189
  %401 = vmatpush1.bf16.msra.mxu0 %v188
  %402 = vmatprep.subr.bf16.mxu0 %v193
  %403 = vmatpush1.bf16.msra.mxu0 %v192
  %404 = vmatprep.subr.bf16.mxu0 %v197
  %405 = vmatpush1.bf16.msra.mxu0 %v196
  %406 = vmatprep.subr.bf16.mxu0 0
  %407 = vmatpush1.bf16.msra.mxu0 0
  %408 = vmatprep.subr.bf16.mxu0 0
  %409 = vmatpush1.bf16.msra.mxu0 0
  %410 = vmatprep.subr.bf16.mxu0 0
  %411 = vmatpush1.bf16.msra.mxu0 0
  %412 = vmatprep.subr.bf16.mxu0 0
  %413 = vmatpush1.bf16.msra.mxu0 0
  %414 = vmatprep.subr.bf16.mxu0 0
  %415 = vmatpush1.bf16.msra.mxu0 0
  %416 = vmatprep.subr.bf16.mxu0 0
  %417 = vmatpush1.bf16.msra.mxu0 0
  %418 = vmatprep.subr.bf16.mxu0 0
  %419 = vmatpush1.bf16.msra.mxu0 0
  %420 = vmatprep.subr.bf16.mxu0 0
  %421 = vmatpush1.bf16.msra.mxu0 0
  %422 = vmatprep.mubr.bf16.mxu0 0
  %423 = vmatmul.mubr.bf16.gmra.mrb[0].mxu0 %v340
  %v424 = vpop.f32.mrb[0].mxu0
  %v425 = vadd.f32 0.0, %v424
  %v426 = vpop.f32.mrb[0].mxu0
  %v427 = vadd.f32 0.0, %v426
  %v428 = vpop.f32.mrb[0].mxu0
  %v429 = vpop.f32.mrb[0].mxu0
  %430 = vdwg.mxu0
  %v431 = vadd.f32 %v345, %v384
  %v432 = vadd.f32 %v346, %v386
  %v433 = vadd.f32 %v347, %v425
  %v434 = vadd.f32 %v348, %v427
  %v435 = vxor.u32 %v431, 2147483648
  %v436 = vmul.f32 %v435, 1.442695
  %v437 = vpow.pop %v436
  %v438 = vadd.f32 %v437, 1.0
  %v439 = vrcp.pop %v438
  %v440 = vmul.f32 1.0, %v439
  %v441 = vxor.u32 %v432, 2147483648
  %v442 = vmul.f32 %v441, 1.442695
  %v443 = vpow.pop %v442
  %v444 = vadd.f32 %v443, 1.0
  %v445 = vrcp.pop %v444
  %v446 = vmul.f32 1.0, %v445
  %v447 = vxor.u32 %v433, 2147483648
  %v448 = vmul.f32 %v447, 1.442695
  %v449 = vpow.pop %v448
  %v450 = vadd.f32 %v449, 1.0
  %v451 = vrcp.pop %v450
  %v452 = vmul.f32 1.0, %v451
  %v453 = vtanh.pop %v434
  %v454 = vmul.f32 %v446, %v453
  %v455 = vmul.f32 %v440, %v337
  %v456 = vadd.f32 %v454, %v455
  %v457 = vtanh.pop %v456
  %v458 = vmul.f32 %v452, %v457
  %v459 = vpack.c.bf16 %v458, %v458
  %s460 = scalar_lea.vmem %s4, 4
  %461 = vst [vmem:[%s460] sm:$0xf] %v459
  %s462 = scalar_lea.vmem %s0, 32
  %v463 = vld [vmem:[%s462] sm:$0xff]
  %v464 = vld [vmem:[%s462 + $0x8] sm:$0xff]
  %v465 = vunpack.c.l.bf16 %v463
  %v466 = vunpack.c.h.bf16 %v463
  %v467 = vunpack.c.l.bf16 %v464
  %v468 = vunpack.c.h.bf16 %v464
  %469 = vmatprep.subr.bf16.mxu0 %v167
  %470 = vmatpush1.bf16.msra.mxu0 %v166
  %471 = vmatprep.subr.bf16.mxu0 %v171
  %472 = vmatpush1.bf16.msra.mxu0 %v170
  %473 = vmatprep.subr.bf16.mxu0 %v175
  %474 = vmatpush1.bf16.msra.mxu0 %v174
  %475 = vmatprep.subr.bf16.mxu0 %v179
  %476 = vmatpush1.bf16.msra.mxu0 %v178
  %477 = vmatprep.subr.bf16.mxu0 %v183
  %478 = vmatpush1.bf16.msra.mxu0 %v182
  %479 = vmatprep.subr.bf16.mxu0 %v187
  %480 = vmatpush1.bf16.msra.mxu0 %v186
  %481 = vmatprep.subr.bf16.mxu0 %v191
  %482 = vmatpush1.bf16.msra.mxu0 %v190
  %483 = vmatprep.subr.bf16.mxu0 %v195
  %484 = vmatpush1.bf16.msra.mxu0 %v194
  %485 = vmatprep.subr.bf16.mxu0 0
  %486 = vmatpush1.bf16.msra.mxu0 0
  %487 = vmatprep.subr.bf16.mxu0 0
  %488 = vmatpush1.bf16.msra.mxu0 0
  %489 = vmatprep.subr.bf16.mxu0 0
  %490 = vmatpush1.bf16.msra.mxu0 0
  %491 = vmatprep.subr.bf16.mxu0 0
  %492 = vmatpush1.bf16.msra.mxu0 0
  %493 = vmatprep.subr.bf16.mxu0 0
  %494 = vmatpush1.bf16.msra.mxu0 0
  %495 = vmatprep.subr.bf16.mxu0 0
  %496 = vmatpush1.bf16.msra.mxu0 0
  %497 = vmatprep.subr.bf16.mxu0 0
  %498 = vmatpush1.bf16.msra.mxu0 0
  %499 = vmatprep.subr.bf16.mxu0 0
  %500 = vmatpush1.bf16.msra.mxu0 0
  %501 = vmatprep.mubr.bf16.mxu0 0
  %502 = vmatmul.mubr.bf16.gmra.mrb[0].mxu0 %v459
  %v503 = vpop.f32.mrb[0].mxu0
  %v504 = vadd.f32 0.0, %v503
  %v505 = vpop.f32.mrb[0].mxu0
  %v506 = vadd.f32 0.0, %v505
  %v507 = vpop.f32.mrb[0].mxu0
  %v508 = vpop.f32.mrb[0].mxu0
  %509 = vdwg.mxu0
  %510 = vmatprep.subr.bf16.mxu0 %v169
  %511 = vmatpush1.bf16.msra.mxu0 %v168
  %512 = vmatprep.subr.bf16.mxu0 %v173
  %513 = vmatpush1.bf16.msra.mxu0 %v172
  %514 = vmatprep.subr.bf16.mxu0 %v177
  %515 = vmatpush1.bf16.msra.mxu0 %v176
  %516 = vmatprep.subr.bf16.mxu0 %v181
  %517 = vmatpush1.bf16.msra.mxu0 %v180
  %518 = vmatprep.subr.bf16.mxu0 %v185
  %519 = vmatpush1.bf16.msra.mxu0 %v184
  %520 = vmatprep.subr.bf16.mxu0 %v189
  %521 = vmatpush1.bf16.msra.mxu0 %v188
  %522 = vmatprep.subr.bf16.mxu0 %v193
  %523 = vmatpush1.bf16.msra.mxu0 %v192
  %524 = vmatprep.subr.bf16.mxu0 %v197
  %525 = vmatpush1.bf16.msra.mxu0 %v196
  %526 = vmatprep.subr.bf16.mxu0 0
  %527 = vmatpush1.bf16.msra.mxu0 0
  %528 = vmatprep.subr.bf16.mxu0 0
  %529 = vmatpush1.bf16.msra.mxu0 0
  %530 = vmatprep.subr.bf16.mxu0 0
  %531 = vmatpush1.bf16.msra.mxu0 0
  %532 = vmatprep.subr.bf16.mxu0 0
  %533 = vmatpush1.bf16.msra.mxu0 0
  %534 = vmatprep.subr.bf16.mxu0 0
  %535 = vmatpush1.bf16.msra.mxu0 0
  %536 = vmatprep.subr.bf16.mxu0 0
  %537 = vmatpush1.bf16.msra.mxu0 0
  %538 = vmatprep.subr.bf16.mxu0 0
  %539 = vmatpush1.bf16.msra.mxu0 0
  %540 = vmatprep.subr.bf16.mxu0 0
  %541 = vmatpush1.bf16.msra.mxu0 0
  %542 = vmatprep.mubr.bf16.mxu0 0
  %543 = vmatmul.mubr.bf16.gmra.mrb[0].mxu0 %v459
  %v544 = vpop.f32.mrb[0].mxu0
  %v545 = vadd.f32 0.0, %v544
  %v546 = vpop.f32.mrb[0].mxu0
  %v547 = vadd.f32 0.0, %v546
  %v548 = vpop.f32.mrb[0].mxu0
  %v549 = vpop.f32.mrb[0].mxu0
  %550 = vdwg.mxu0
  %v551 = vadd.f32 %v465, %v504
  %v552 = vadd.f32 %v466, %v506
  %v553 = vadd.f32 %v467, %v545
  %v554 = vadd.f32 %v468, %v547
  %v555 = vxor.u32 %v551, 2147483648
  %v556 = vmul.f32 %v555, 1.442695
  %v557 = vpow.pop %v556
  %v558 = vadd.f32 %v557, 1.0
  %v559 = vrcp.pop %v558
  %v560 = vmul.f32 1.0, %v559
  %v561 = vxor.u32 %v552, 2147483648
  %v562 = vmul.f32 %v561, 1.442695
  %v563 = vpow.pop %v562
  %v564 = vadd.f32 %v563, 1.0
  %v565 = vrcp.pop %v564
  %v566 = vmul.f32 1.0, %v565
  %v567 = vxor.u32 %v553, 2147483648
  %v568 = vmul.f32 %v567, 1.442695
  %v569 = vpow.pop %v568
  %v570 = vadd.f32 %v569, 1.0
  %v571 = vrcp.pop %v570
  %v572 = vmul.f32 1.0, %v571
  %v573 = vtanh.pop %v554
  %v574 = vmul.f32 %v566, %v573
  %v575 = vmul.f32 %v560, %v456
  %v576 = vadd.f32 %v574, %v575
  %v577 = vtanh.pop %v576
  %v578 = vmul.f32 %v572, %v577
  %v579 = vpack.c.bf16 %v578, %v578
  %s580 = scalar_lea.vmem %s4, 8
  %581 = vst [vmem:[%s580] sm:$0xf] %v579
  %s582 = scalar_lea.vmem %s0, 48
  %v583 = vld [vmem:[%s582] sm:$0xff]
  %v584 = vld [vmem:[%s582 + $0x8] sm:$0xff]
  %v585 = vunpack.c.l.bf16 %v583
  %v586 = vunpack.c.h.bf16 %v583
  %v587 = vunpack.c.l.bf16 %v584
  %v588 = vunpack.c.h.bf16 %v584
  %589 = vmatprep.subr.bf16.mxu0 %v167
  %590 = vmatpush1.bf16.msra.mxu0 %v166
  %591 = vmatprep.subr.bf16.mxu0 %v171
  %592 = vmatpush1.bf16.msra.mxu0 %v170
  %593 = vmatprep.subr.bf16.mxu0 %v175
  %594 = vmatpush1.bf16.msra.mxu0 %v174
  %595 = vmatprep.subr.bf16.mxu0 %v179
  %596 = vmatpush1.bf16.msra.mxu0 %v178
  %597 = vmatprep.subr.bf16.mxu0 %v183
  %598 = vmatpush1.bf16.msra.mxu0 %v182
  %599 = vmatprep.subr.bf16.mxu0 %v187
  %600 = vmatpush1.bf16.msra.mxu0 %v186
  %601 = vmatprep.subr.bf16.mxu0 %v191
  %602 = vmatpush1.bf16.msra.mxu0 %v190
  %603 = vmatprep.subr.bf16.mxu0 %v195
  %604 = vmatpush1.bf16.msra.mxu0 %v194
  %605 = vmatprep.subr.bf16.mxu0 0
  %606 = vmatpush1.bf16.msra.mxu0 0
  %607 = vmatprep.subr.bf16.mxu0 0
  %608 = vmatpush1.bf16.msra.mxu0 0
  %609 = vmatprep.subr.bf16.mxu0 0
  %610 = vmatpush1.bf16.msra.mxu0 0
  %611 = vmatprep.subr.bf16.mxu0 0
  %612 = vmatpush1.bf16.msra.mxu0 0
  %613 = vmatprep.subr.bf16.mxu0 0
  %614 = vmatpush1.bf16.msra.mxu0 0
  %615 = vmatprep.subr.bf16.mxu0 0
  %616 = vmatpush1.bf16.msra.mxu0 0
  %617 = vmatprep.subr.bf16.mxu0 0
  %618 = vmatpush1.bf16.msra.mxu0 0
  %619 = vmatprep.subr.bf16.mxu0 0
  %620 = vmatpush1.bf16.msra.mxu0 0
  %621 = vmatprep.mubr.bf16.mxu0 0
  %622 = vmatmul.mubr.bf16.gmra.mrb[0].mxu0 %v579
  %v623 = vpop.f32.mrb[0].mxu0
  %v624 = vadd.f32 0.0, %v623
  %v625 = vpop.f32.mrb[0].mxu0
  %v626 = vadd.f32 0.0, %v625
  %v627 = vpop.f32.mrb[0].mxu0
  %v628 = vpop.f32.mrb[0].mxu0
  %629 = vdwg.mxu0
  %630 = vmatprep.subr.bf16.mxu0 %v169
  %631 = vmatpush1.bf16.msra.mxu0 %v168
  %632 = vmatprep.subr.bf16.mxu0 %v173
  %633 = vmatpush1.bf16.msra.mxu0 %v172
  %634 = vmatprep.subr.bf16.mxu0 %v177
  %635 = vmatpush1.bf16.msra.mxu0 %v176
  %636 = vmatprep.subr.bf16.mxu0 %v181
  %637 = vmatpush1.bf16.msra.mxu0 %v180
  %638 = vmatprep.subr.bf16.mxu0 %v185
  %639 = vmatpush1.bf16.msra.mxu0 %v184
  %640 = vmatprep.subr.bf16.mxu0 %v189
  %641 = vmatpush1.bf16.msra.mxu0 %v188
  %642 = vmatprep.subr.bf16.mxu0 %v193
  %643 = vmatpush1.bf16.msra.mxu0 %v192
  %644 = vmatprep.subr.bf16.mxu0 %v197
  %645 = vmatpush1.bf16.msra.mxu0 %v196
  %646 = vmatprep.subr.bf16.mxu0 0
  %647 = vmatpush1.bf16.msra.mxu0 0
  %648 = vmatprep.subr.bf16.mxu0 0
  %649 = vmatpush1.bf16.msra.mxu0 0
  %650 = vmatprep.subr.bf16.mxu0 0
  %651 = vmatpush1.bf16.msra.mxu0 0
  %652 = vmatprep.subr.bf16.mxu0 0
  %653 = vmatpush1.bf16.msra.mxu0 0
  %654 = vmatprep.subr.bf16.mxu0 0
  %655 = vmatpush1.bf16.msra.mxu0 0
  %656 = vmatprep.subr.bf16.mxu0 0
  %657 = vmatpush1.bf16.msra.mxu0 0
  %658 = vmatprep.subr.bf16.mxu0 0
  %659 = vmatpush1.bf16.msra.mxu0 0
  %660 = vmatprep.subr.bf16.mxu0 0
  %661 = vmatpush1.bf16.msra.mxu0 0
  %662 = vmatprep.mubr.bf16.mxu0 0
  %663 = vmatmul.mubr.bf16.gmra.mrb[0].mxu0 %v579
  %v664 = vpop.f32.mrb[0].mxu0
  %v665 = vadd.f32 0.0, %v664
  %v666 = vpop.f32.mrb[0].mxu0
  %v667 = vadd.f32 0.0, %v666
  %v668 = vpop.f32.mrb[0].mxu0
  %v669 = vpop.f32.mrb[0].mxu0
  %670 = vdwg.mxu0
  %v671 = vadd.f32 %v585, %v624
  %v672 = vadd.f32 %v586, %v626
  %v673 = vadd.f32 %v587, %v665
  %v674 = vadd.f32 %v588, %v667
  %v675 = vxor.u32 %v671, 2147483648
  %v676 = vmul.f32 %v675, 1.442695
  %v677 = vpow.pop %v676
  %v678 = vadd.f32 %v677, 1.0
  %v679 = vrcp.pop %v678
  %v680 = vmul.f32 1.0, %v679
  %v681 = vxor.u32 %v672, 2147483648
  %v682 = vmul.f32 %v681, 1.442695
  %v683 = vpow.pop %v682
  %v684 = vadd.f32 %v683, 1.0
  %v685 = vrcp.pop %v684
  %v686 = vmul.f32 1.0, %v685
  %v687 = vxor.u32 %v673, 2147483648
  %v688 = vmul.f32 %v687, 1.442695
  %v689 = vpow.pop %v688
  %v690 = vadd.f32 %v689, 1.0
  %v691 = vrcp.pop %v690
  %v692 = vmul.f32 1.0, %v691
  %v693 = vtanh.pop %v674
  %v694 = vmul.f32 %v686, %v693
  %v695 = vmul.f32 %v680, %v576
  %v696 = vadd.f32 %v694, %v695
  %v697 = vtanh.pop %v696
  %v698 = vmul.f32 %v692, %v697
  %v699 = vpack.c.bf16 %v698, %v698
  %s700 = scalar_lea.vmem %s4, 12
  %701 = vst [vmem:[%s700] sm:$0xf] %v699
  %s702 = scalar_lea.vmem %s0, 64
  %v703 = vld [vmem:[%s702] sm:$0xff]
  %v704 = vld [vmem:[%s702 + $0x8] sm:$0xff]
  %v705 = vunpack.c.l.bf16 %v703
  %v706 = vunpack.c.h.bf16 %v703
  %v707 = vunpack.c.l.bf16 %v704
  %v708 = vunpack.c.h.bf16 %v704
  %709 = vmatprep.subr.bf16.mxu0 %v167
  %710 = vmatpush1.bf16.msra.mxu0 %v166
  %711 = vmatprep.subr.bf16.mxu0 %v171
  %712 = vmatpush1.bf16.msra.mxu0 %v170
  %713 = vmatprep.subr.bf16.mxu0 %v175
  %714 = vmatpush1.bf16.msra.mxu0 %v174
  %715 = vmatprep.subr.bf16.mxu0 %v179
  %716 = vmatpush1.bf16.msra.mxu0 %v178
  %717 = vmatprep.subr.bf16.mxu0 %v183
  %718 = vmatpush1.bf16.msra.mxu0 %v182
  %719 = vmatprep.subr.bf16.mxu0 %v187
  %720 = vmatpush1.bf16.msra.mxu0 %v186
  %721 = vmatprep.subr.bf16.mxu0 %v191
  %722 = vmatpush1.bf16.msra.mxu0 %v190
  %723 = vmatprep.subr.bf16.mxu0 %v195
  %724 = vmatpush1.bf16.msra.mxu0 %v194
  %725 = vmatprep.subr.bf16.mxu0 0
  %726 = vmatpush1.bf16.msra.mxu0 0
  %727 = vmatprep.subr.bf16.mxu0 0
  %728 = vmatpush1.bf16.msra.mxu0 0
  %729 = vmatprep.subr.bf16.mxu0 0
  %730 = vmatpush1.bf16.msra.mxu0 0
  %731 = vmatprep.subr.bf16.mxu0 0
  %732 = vmatpush1.bf16.msra.mxu0 0
  %733 = vmatprep.subr.bf16.mxu0 0
  %734 = vmatpush1.bf16.msra.mxu0 0
  %735 = vmatprep.subr.bf16.mxu0 0
  %736 = vmatpush1.bf16.msra.mxu0 0
  %737 = vmatprep.subr.bf16.mxu0 0
  %738 = vmatpush1.bf16.msra.mxu0 0
  %739 = vmatprep.subr.bf16.mxu0 0
  %740 = vmatpush1.bf16.msra.mxu0 0
  %741 = vmatprep.mubr.bf16.mxu0 0
  %742 = vmatmul.mubr.bf16.gmra.mrb[0].mxu0 %v699
  %v743 = vpop.f32.mrb[0].mxu0
  %v744 = vadd.f32 0.0, %v743
  %v745 = vpop.f32.mrb[0].mxu0
  %v746 = vadd.f32 0.0, %v745
  %v747 = vpop.f32.mrb[0].mxu0
  %v748 = vpop.f32.mrb[0].mxu0
  %749 = vdwg.mxu0
  %750 = vmatprep.subr.bf16.mxu0 %v169
  %751 = vmatpush1.bf16.msra.mxu0 %v168
  %752 = vmatprep.subr.bf16.mxu0 %v173
  %753 = vmatpush1.bf16.msra.mxu0 %v172
  %754 = vmatprep.subr.bf16.mxu0 %v177
  %755 = vmatpush1.bf16.msra.mxu0 %v176
  %756 = vmatprep.subr.bf16.mxu0 %v181
  %757 = vmatpush1.bf16.msra.mxu0 %v180
  %758 = vmatprep.subr.bf16.mxu0 %v185
  %759 = vmatpush1.bf16.msra.mxu0 %v184
  %760 = vmatprep.subr.bf16.mxu0 %v189
  %761 = vmatpush1.bf16.msra.mxu0 %v188
  %762 = vmatprep.subr.bf16.mxu0 %v193
  %763 = vmatpush1.bf16.msra.mxu0 %v192
  %764 = vmatprep.subr.bf16.mxu0 %v197
  %765 = vmatpush1.bf16.msra.mxu0 %v196
  %766 = vmatprep.subr.bf16.mxu0 0
  %767 = vmatpush1.bf16.msra.mxu0 0
  %768 = vmatprep.subr.bf16.mxu0 0
  %769 = vmatpush1.bf16.msra.mxu0 0
  %770 = vmatprep.subr.bf16.mxu0 0
  %771 = vmatpush1.bf16.msra.mxu0 0
  %772 = vmatprep.subr.bf16.mxu0 0
  %773 = vmatpush1.bf16.msra.mxu0 0
  %774 = vmatprep.subr.bf16.mxu0 0
  %775 = vmatpush1.bf16.msra.mxu0 0
  %776 = vmatprep.subr.bf16.mxu0 0
  %777 = vmatpush1.bf16.msra.mxu0 0
  %778 = vmatprep.subr.bf16.mxu0 0
  %779 = vmatpush1.bf16.msra.mxu0 0
  %780 = vmatprep.subr.bf16.mxu0 0
  %781 = vmatpush1.bf16.msra.mxu0 0
  %782 = vmatprep.mubr.bf16.mxu0 0
  %783 = vmatmul.mubr.bf16.gmra.mrb[0].mxu0 %v699
  %v784 = vpop.f32.mrb[0].mxu0
  %v785 = vadd.f32 0.0, %v784
  %v786 = vpop.f32.mrb[0].mxu0
  %v787 = vadd.f32 0.0, %v786
  %v788 = vpop.f32.mrb[0].mxu0
  %v789 = vpop.f32.mrb[0].mxu0
  %790 = vdwg.mxu0
  %v791 = vadd.f32 %v705, %v744
  %v792 = vadd.f32 %v706, %v746
  %v793 = vadd.f32 %v707, %v785
  %v794 = vadd.f32 %v708, %v787
  %v795 = vxor.u32 %v791, 2147483648
  %v796 = vmul.f32 %v795, 1.442695
  %v797 = vpow.pop %v796
  %v798 = vadd.f32 %v797, 1.0
  %v799 = vrcp.pop %v798
  %v800 = vmul.f32 1.0, %v799
  %v801 = vxor.u32 %v792, 2147483648
  %v802 = vmul.f32 %v801, 1.442695
  %v803 = vpow.pop %v802
  %v804 = vadd.f32 %v803, 1.0
  %v805 = vrcp.pop %v804
  %v806 = vmul.f32 1.0, %v805
  %v807 = vxor.u32 %v793, 2147483648
  %v808 = vmul.f32 %v807, 1.442695
  %v809 = vpow.pop %v808
  %v810 = vadd.f32 %v809, 1.0
  %v811 = vrcp.pop %v810
  %v812 = vmul.f32 1.0, %v811
  %v813 = vtanh.pop %v794
  %v814 = vmul.f32 %v806, %v813
  %v815 = vmul.f32 %v800, %v696
  %v816 = vadd.f32 %v814, %v815
  %v817 = vtanh.pop %v816
  %v818 = vmul.f32 %v812, %v817
  %v819 = vpack.c.bf16 %v818, %v818
  %s820 = scalar_lea.vmem %s4, 16
  %821 = vst [vmem:[%s820] sm:$0xf] %v819
  %s822 = scalar_lea.vmem %s0, 80
  %v823 = vld [vmem:[%s822] sm:$0xff]
  %v824 = vld [vmem:[%s822 + $0x8] sm:$0xff]
  %v825 = vunpack.c.l.bf16 %v823
  %v826 = vunpack.c.h.bf16 %v823
  %v827 = vunpack.c.l.bf16 %v824
  %v828 = vunpack.c.h.bf16 %v824
  %829 = vmatprep.subr.bf16.mxu0 %v167
  %830 = vmatpush1.bf16.msra.mxu0 %v166
  %831 = vmatprep.subr.bf16.mxu0 %v171
  %832 = vmatpush1.bf16.msra.mxu0 %v170
  %833 = vmatprep.subr.bf16.mxu0 %v175
  %834 = vmatpush1.bf16.msra.mxu0 %v174
  %835 = vmatprep.subr.bf16.mxu0 %v179
  %836 = vmatpush1.bf16.msra.mxu0 %v178
  %837 = vmatprep.subr.bf16.mxu0 %v183
  %838 = vmatpush1.bf16.msra.mxu0 %v182
  %839 = vmatprep.subr.bf16.mxu0 %v187
  %840 = vmatpush1.bf16.msra.mxu0 %v186
  %841 = vmatprep.subr.bf16.mxu0 %v191
  %842 = vmatpush1.bf16.msra.mxu0 %v190
  %843 = vmatprep.subr.bf16.mxu0 %v195
  %844 = vmatpush1.bf16.msra.mxu0 %v194
  %845 = vmatprep.subr.bf16.mxu0 0
  %846 = vmatpush1.bf16.msra.mxu0 0
  %847 = vmatprep.subr.bf16.mxu0 0
  %848 = vmatpush1.bf16.msra.mxu0 0
  %849 = vmatprep.subr.bf16.mxu0 0
  %850 = vmatpush1.bf16.msra.mxu0 0
  %851 = vmatprep.subr.bf16.mxu0 0
  %852 = vmatpush1.bf16.msra.mxu0 0
  %853 = vmatprep.subr.bf16.mxu0 0
  %854 = vmatpush1.bf16.msra.mxu0 0
  %855 = vmatprep.subr.bf16.mxu0 0
  %856 = vmatpush1.bf16.msra.mxu0 0
  %857 = vmatprep.subr.bf16.mxu0 0
  %858 = vmatpush1.bf16.msra.mxu0 0
  %859 = vmatprep.subr.bf16.mxu0 0
  %860 = vmatpush1.bf16.msra.mxu0 0
  %861 = vmatprep.mubr.bf16.mxu0 0
  %862 = vmatmul.mubr.bf16.gmra.mrb[0].mxu0 %v819
  %v863 = vpop.f32.mrb[0].mxu0
  %v864 = vadd.f32 0.0, %v863
  %v865 = vpop.f32.mrb[0].mxu0
  %v866 = vadd.f32 0.0, %v865
  %v867 = vpop.f32.mrb[0].mxu0
  %v868 = vpop.f32.mrb[0].mxu0
  %869 = vdwg.mxu0
  %870 = vmatprep.subr.bf16.mxu0 %v169
  %871 = vmatpush1.bf16.msra.mxu0 %v168
  %872 = vmatprep.subr.bf16.mxu0 %v173
  %873 = vmatpush1.bf16.msra.mxu0 %v172
  %874 = vmatprep.subr.bf16.mxu0 %v177
  %875 = vmatpush1.bf16.msra.mxu0 %v176
  %876 = vmatprep.subr.bf16.mxu0 %v181
  %877 = vmatpush1.bf16.msra.mxu0 %v180
  %878 = vmatprep.subr.bf16.mxu0 %v185
  %879 = vmatpush1.bf16.msra.mxu0 %v184
  %880 = vmatprep.subr.bf16.mxu0 %v189
  %881 = vmatpush1.bf16.msra.mxu0 %v188
  %882 = vmatprep.subr.bf16.mxu0 %v193
  %883 = vmatpush1.bf16.msra.mxu0 %v192
  %884 = vmatprep.subr.bf16.mxu0 %v197
  %885 = vmatpush1.bf16.msra.mxu0 %v196
  %886 = vmatprep.subr.bf16.mxu0 0
  %887 = vmatpush1.bf16.msra.mxu0 0
  %888 = vmatprep.subr.bf16.mxu0 0
  %889 = vmatpush1.bf16.msra.mxu0 0
  %890 = vmatprep.subr.bf16.mxu0 0
  %891 = vmatpush1.bf16.msra.mxu0 0
  %892 = vmatprep.subr.bf16.mxu0 0
  %893 = vmatpush1.bf16.msra.mxu0 0
  %894 = vmatprep.subr.bf16.mxu0 0
  %895 = vmatpush1.bf16.msra.mxu0 0
  %896 = vmatprep.subr.bf16.mxu0 0
  %897 = vmatpush1.bf16.msra.mxu0 0
  %898 = vmatprep.subr.bf16.mxu0 0
  %899 = vmatpush1.bf16.msra.mxu0 0
  %900 = vmatprep.subr.bf16.mxu0 0
  %901 = vmatpush1.bf16.msra.mxu0 0
  %902 = vmatprep.mubr.bf16.mxu0 0
  %903 = vmatmul.mubr.bf16.gmra.mrb[0].mxu0 %v819
  %v904 = vpop.f32.mrb[0].mxu0
  %v905 = vadd.f32 0.0, %v904
  %v906 = vpop.f32.mrb[0].mxu0
  %v907 = vadd.f32 0.0, %v906
  %v908 = vpop.f32.mrb[0].mxu0
  %v909 = vpop.f32.mrb[0].mxu0
  %910 = vdwg.mxu0
  %v911 = vadd.f32 %v825, %v864
  %v912 = vadd.f32 %v826, %v866
  %v913 = vadd.f32 %v827, %v905
  %v914 = vadd.f32 %v828, %v907
  %v915 = vxor.u32 %v911, 2147483648
  %v916 = vmul.f32 %v915, 1.442695
  %v917 = vpow.pop %v916
  %v918 = vadd.f32 %v917, 1.0
  %v919 = vrcp.pop %v918
  %v920 = vmul.f32 1.0, %v919
  %v921 = vxor.u32 %v912, 2147483648
  %v922 = vmul.f32 %v921, 1.442695
  %v923 = vpow.pop %v922
  %v924 = vadd.f32 %v923, 1.0
  %v925 = vrcp.pop %v924
  %v926 = vmul.f32 1.0, %v925
  %v927 = vxor.u32 %v913, 2147483648
  %v928 = vmul.f32 %v927, 1.442695
  %v929 = vpow.pop %v928
  %v930 = vadd.f32 %v929, 1.0
  %v931 = vrcp.pop %v930
  %v932 = vmul.f32 1.0, %v931
  %v933 = vtanh.pop %v914
  %v934 = vmul.f32 %v926, %v933
  %v935 = vmul.f32 %v920, %v816
  %v936 = vadd.f32 %v934, %v935
  %v937 = vtanh.pop %v936
  %v938 = vmul.f32 %v932, %v937
  %v939 = vpack.c.bf16 %v938, %v938
  %s940 = scalar_lea.vmem %s4, 20
  %941 = vst [vmem:[%s940] sm:$0xf] %v939
  %s942 = scalar_lea.vmem %s0, 96
  %v943 = vld [vmem:[%s942] sm:$0xff]
  %v944 = vld [vmem:[%s942 + $0x8] sm:$0xff]
  %v945 = vunpack.c.l.bf16 %v943
  %v946 = vunpack.c.h.bf16 %v943
  %v947 = vunpack.c.l.bf16 %v944
  %v948 = vunpack.c.h.bf16 %v944
  %949 = vmatprep.subr.bf16.mxu0 %v167
  %950 = vmatpush1.bf16.msra.mxu0 %v166
  %951 = vmatprep.subr.bf16.mxu0 %v171
  %952 = vmatpush1.bf16.msra.mxu0 %v170
  %953 = vmatprep.subr.bf16.mxu0 %v175
  %954 = vmatpush1.bf16.msra.mxu0 %v174
  %955 = vmatprep.subr.bf16.mxu0 %v179
  %956 = vmatpush1.bf16.msra.mxu0 %v178
  %957 = vmatprep.subr.bf16.mxu0 %v183
  %958 = vmatpush1.bf16.msra.mxu0 %v182
  %959 = vmatprep.subr.bf16.mxu0 %v187
  %960 = vmatpush1.bf16.msra.mxu0 %v186
  %961 = vmatprep.subr.bf16.mxu0 %v191
  %962 = vmatpush1.bf16.msra.mxu0 %v190
  %963 = vmatprep.subr.bf16.mxu0 %v195
  %964 = vmatpush1.bf16.msra.mxu0 %v194
  %965 = vmatprep.subr.bf16.mxu0 0
  %966 = vmatpush1.bf16.msra.mxu0 0
  %967 = vmatprep.subr.bf16.mxu0 0
  %968 = vmatpush1.bf16.msra.mxu0 0
  %969 = vmatprep.subr.bf16.mxu0 0
  %970 = vmatpush1.bf16.msra.mxu0 0
  %971 = vmatprep.subr.bf16.mxu0 0
  %972 = vmatpush1.bf16.msra.mxu0 0
  %973 = vmatprep.subr.bf16.mxu0 0
  %974 = vmatpush1.bf16.msra.mxu0 0
  %975 = vmatprep.subr.bf16.mxu0 0
  %976 = vmatpush1.bf16.msra.mxu0 0
  %977 = vmatprep.subr.bf16.mxu0 0
  %978 = vmatpush1.bf16.msra.mxu0 0
  %979 = vmatprep.subr.bf16.mxu0 0
  %980 = vmatpush1.bf16.msra.mxu0 0
  %981 = vmatprep.mubr.bf16.mxu0 0
  %982 = vmatmul.mubr.bf16.gmra.mrb[0].mxu0 %v939
  %v983 = vpop.f32.mrb[0].mxu0
  %v984 = vadd.f32 0.0, %v983
  %v985 = vpop.f32.mrb[0].mxu0
  %v986 = vadd.f32 0.0, %v985
  %v987 = vpop.f32.mrb[0].mxu0
  %v988 = vpop.f32.mrb[0].mxu0
  %989 = vdwg.mxu0
  %990 = vmatprep.subr.bf16.mxu0 %v169
  %991 = vmatpush1.bf16.msra.mxu0 %v168
  %992 = vmatprep.subr.bf16.mxu0 %v173
  %993 = vmatpush1.bf16.msra.mxu0 %v172
  %994 = vmatprep.subr.bf16.mxu0 %v177
  %995 = vmatpush1.bf16.msra.mxu0 %v176
  %996 = vmatprep.subr.bf16.mxu0 %v181
  %997 = vmatpush1.bf16.msra.mxu0 %v180
  %998 = vmatprep.subr.bf16.mxu0 %v185
  %999 = vmatpush1.bf16.msra.mxu0 %v184
  %1000 = vmatprep.subr.bf16.mxu0 %v189
  %1001 = vmatpush1.bf16.msra.mxu0 %v188
  %1002 = vmatprep.subr.bf16.mxu0 %v193
  %1003 = vmatpush1.bf16.msra.mxu0 %v192
  %1004 = vmatprep.subr.bf16.mxu0 %v197
  %1005 = vmatpush1.bf16.msra.mxu0 %v196
  %1006 = vmatprep.subr.bf16.mxu0 0
  %1007 = vmatpush1.bf16.msra.mxu0 0
  %1008 = vmatprep.subr.bf16.mxu0 0
  %1009 = vmatpush1.bf16.msra.mxu0 0
  %1010 = vmatprep.subr.bf16.mxu0 0
  %1011 = vmatpush1.bf16.msra.mxu0 0
  %1012 = vmatprep.subr.bf16.mxu0 0
  %1013 = vmatpush1.bf16.msra.mxu0 0
  %1014 = vmatprep.subr.bf16.mxu0 0
  %1015 = vmatpush1.bf16.msra.mxu0 0
  %1016 = vmatprep.subr.bf16.mxu0 0
  %1017 = vmatpush1.bf16.msra.mxu0 0
  %1018 = vmatprep.subr.bf16.mxu0 0
  %1019 = vmatpush1.bf16.msra.mxu0 0
  %1020 = vmatprep.subr.bf16.mxu0 0
  %1021 = vmatpush1.bf16.msra.mxu0 0
  %1022 = vmatprep.mubr.bf16.mxu0 0
  %1023 = vmatmul.mubr.bf16.gmra.mrb[0].mxu0 %v939
  %v1024 = vpop.f32.mrb[0].mxu0
  %v1025 = vadd.f32 0.0, %v1024
  %v1026 = vpop.f32.mrb[0].mxu0
  %v1027 = vadd.f32 0.0, %v1026
  %v1028 = vpop.f32.mrb[0].mxu0
  %v1029 = vpop.f32.mrb[0].mxu0
  %1030 = vdwg.mxu0
  %v1031 = vadd.f32 %v945, %v984
  %v1032 = vadd.f32 %v946, %v986
  %v1033 = vadd.f32 %v947, %v1025
  %v1034 = vadd.f32 %v948, %v1027
  %v1035 = vxor.u32 %v1031, 2147483648
  %v1036 = vmul.f32 %v1035, 1.442695
  %v1037 = vpow.pop %v1036
  %v1038 = vadd.f32 %v1037, 1.0
  %v1039 = vrcp.pop %v1038
  %v1040 = vmul.f32 1.0, %v1039
  %v1041 = vxor.u32 %v1032, 2147483648
  %v1042 = vmul.f32 %v1041, 1.442695
  %v1043 = vpow.pop %v1042
  %v1044 = vadd.f32 %v1043, 1.0
  %v1045 = vrcp.pop %v1044
  %v1046 = vmul.f32 1.0, %v1045
  %v1047 = vxor.u32 %v1033, 2147483648
  %v1048 = vmul.f32 %v1047, 1.442695
  %v1049 = vpow.pop %v1048
  %v1050 = vadd.f32 %v1049, 1.0
  %v1051 = vrcp.pop %v1050
  %v1052 = vmul.f32 1.0, %v1051
  %v1053 = vtanh.pop %v1034
  %v1054 = vmul.f32 %v1046, %v1053
  %v1055 = vmul.f32 %v1040, %v936
  %v1056 = vadd.f32 %v1054, %v1055
  %v1057 = vtanh.pop %v1056
  %v1058 = vmul.f32 %v1052, %v1057
  %v1059 = vpack.c.bf16 %v1058, %v1058
  %s1060 = scalar_lea.vmem %s4, 24
  %1061 = vst [vmem:[%s1060] sm:$0xf] %v1059
  %s1062 = scalar_lea.vmem %s0, 112
  %v1063 = vld [vmem:[%s1062] sm:$0xff]
  %v1064 = vld [vmem:[%s1062 + $0x8] sm:$0xff]
  %v1065 = vunpack.c.l.bf16 %v1063
  %v1066 = vunpack.c.h.bf16 %v1063
  %v1067 = vunpack.c.l.bf16 %v1064
  %v1068 = vunpack.c.h.bf16 %v1064
  %1069 = vmatprep.subr.bf16.mxu0 %v167
  %1070 = vmatpush1.bf16.msra.mxu0 %v166
  %1071 = vmatprep.subr.bf16.mxu0 %v171
  %1072 = vmatpush1.bf16.msra.mxu0 %v170
  %1073 = vmatprep.subr.bf16.mxu0 %v175
  %1074 = vmatpush1.bf16.msra.mxu0 %v174
  %1075 = vmatprep.subr.bf16.mxu0 %v179
  %1076 = vmatpush1.bf16.msra.mxu0 %v178
  %1077 = vmatprep.subr.bf16.mxu0 %v183
  %1078 = vmatpush1.bf16.msra.mxu0 %v182
  %1079 = vmatprep.subr.bf16.mxu0 %v187
  %1080 = vmatpush1.bf16.msra.mxu0 %v186
  %1081 = vmatprep.subr.bf16.mxu0 %v191
  %1082 = vmatpush1.bf16.msra.mxu0 %v190
  %1083 = vmatprep.subr.bf16.mxu0 %v195
  %1084 = vmatpush1.bf16.msra.mxu0 %v194
  %1085 = vmatprep.subr.bf16.mxu0 0
  %1086 = vmatpush1.bf16.msra.mxu0 0
  %1087 = vmatprep.subr.bf16.mxu0 0
  %1088 = vmatpush1.bf16.msra.mxu0 0
  %1089 = vmatprep.subr.bf16.mxu0 0
  %1090 = vmatpush1.bf16.msra.mxu0 0
  %1091 = vmatprep.subr.bf16.mxu0 0
  %1092 = vmatpush1.bf16.msra.mxu0 0
  %1093 = vmatprep.subr.bf16.mxu0 0
  %1094 = vmatpush1.bf16.msra.mxu0 0
  %1095 = vmatprep.subr.bf16.mxu0 0
  %1096 = vmatpush1.bf16.msra.mxu0 0
  %1097 = vmatprep.subr.bf16.mxu0 0
  %1098 = vmatpush1.bf16.msra.mxu0 0
  %1099 = vmatprep.subr.bf16.mxu0 0
  %1100 = vmatpush1.bf16.msra.mxu0 0
  %1101 = vmatprep.mubr.bf16.mxu0 0
  %1102 = vmatmul.mubr.bf16.gmra.mrb[0].mxu0 %v1059
  %v1103 = vpop.f32.mrb[0].mxu0
  %v1104 = vadd.f32 0.0, %v1103
  %v1105 = vpop.f32.mrb[0].mxu0
  %v1106 = vadd.f32 0.0, %v1105
  %v1107 = vpop.f32.mrb[0].mxu0
  %v1108 = vpop.f32.mrb[0].mxu0
  %1109 = vdwg.mxu0
  %1110 = vmatprep.subr.bf16.mxu0 %v169
  %1111 = vmatpush1.bf16.msra.mxu0 %v168
  %1112 = vmatprep.subr.bf16.mxu0 %v173
  %1113 = vmatpush1.bf16.msra.mxu0 %v172
  %1114 = vmatprep.subr.bf16.mxu0 %v177
  %1115 = vmatpush1.bf16.msra.mxu0 %v176
  %1116 = vmatprep.subr.bf16.mxu0 %v181
  %1117 = vmatpush1.bf16.msra.mxu0 %v180
  %1118 = vmatprep.subr.bf16.mxu0 %v185
  %1119 = vmatpush1.bf16.msra.mxu0 %v184
  %1120 = vmatprep.subr.bf16.mxu0 %v189
  %1121 = vmatpush1.bf16.msra.mxu0 %v188
  %1122 = vmatprep.subr.bf16.mxu0 %v193
  %1123 = vmatpush1.bf16.msra.mxu0 %v192
  %1124 = vmatprep.subr.bf16.mxu0 %v197
  %1125 = vmatpush1.bf16.msra.mxu0 %v196
  %1126 = vmatprep.subr.bf16.mxu0 0
  %1127 = vmatpush1.bf16.msra.mxu0 0
  %1128 = vmatprep.subr.bf16.mxu0 0
  %1129 = vmatpush1.bf16.msra.mxu0 0
  %1130 = vmatprep.subr.bf16.mxu0 0
  %1131 = vmatpush1.bf16.msra.mxu0 0
  %1132 = vmatprep.subr.bf16.mxu0 0
  %1133 = vmatpush1.bf16.msra.mxu0 0
  %1134 = vmatprep.subr.bf16.mxu0 0
  %1135 = vmatpush1.bf16.msra.mxu0 0
  %1136 = vmatprep.subr.bf16.mxu0 0
  %1137 = vmatpush1.bf16.msra.mxu0 0
  %1138 = vmatprep.subr.bf16.mxu0 0
  %1139 = vmatpush1.bf16.msra.mxu0 0
  %1140 = vmatprep.subr.bf16.mxu0 0
  %1141 = vmatpush1.bf16.msra.mxu0 0
  %1142 = vmatprep.mubr.bf16.mxu0 0
  %1143 = vmatmul.mubr.bf16.gmra.mrb[0].mxu0 %v1059
  %v1144 = vpop.f32.mrb[0].mxu0
  %v1145 = vadd.f32 0.0, %v1144
  %v1146 = vpop.f32.mrb[0].mxu0
  %v1147 = vadd.f32 0.0, %v1146
  %v1148 = vpop.f32.mrb[0].mxu0
  %v1149 = vpop.f32.mrb[0].mxu0
  %1150 = vdwg.mxu0
  %v1151 = vadd.f32 %v1065, %v1104
  %v1152 = vadd.f32 %v1066, %v1106
  %v1153 = vadd.f32 %v1067, %v1145
  %v1154 = vadd.f32 %v1068, %v1147
  %v1155 = vxor.u32 %v1151, 2147483648
  %v1156 = vmul.f32 %v1155, 1.442695
  %v1157 = vpow.pop %v1156
  %v1158 = vadd.f32 %v1157, 1.0
  %v1159 = vrcp.pop %v1158
  %v1160 = vmul.f32 1.0, %v1159
  %v1161 = vxor.u32 %v1152, 2147483648
  %v1162 = vmul.f32 %v1161, 1.442695
  %v1163 = vpow.pop %v1162
  %v1164 = vadd.f32 %v1163, 1.0
  %v1165 = vrcp.pop %v1164
  %v1166 = vmul.f32 1.0, %v1165
  %v1167 = vxor.u32 %v1153, 2147483648
  %v1168 = vmul.f32 %v1167, 1.442695
  %v1169 = vpow.pop %v1168
  %v1170 = vadd.f32 %v1169, 1.0
  %v1171 = vrcp.pop %v1170
  %v1172 = vmul.f32 1.0, %v1171
  %v1173 = vtanh.pop %v1154
  %v1174 = vmul.f32 %v1166, %v1173
  %v1175 = vmul.f32 %v1160, %v1056
  %v1176 = vadd.f32 %v1174, %v1175
  %v1177 = vtanh.pop %v1176
  %v1178 = vmul.f32 %v1172, %v1177
  %v1179 = vpack.c.bf16 %v1178, %v1178
  %s1180 = scalar_lea.vmem %s4, 28
  %1181 = vst [vmem:[%s1180] sm:$0xf] %v1179
  %1182 = vst [vmem:[#allocation2] sm:$0xff] %v1178
  %1183 = vst [vmem:[#allocation3] sm:$0xff] %v1176
  // Predicated region
  $region22: #{lstm_frame_forward.2} parent=0 // pred_check
    %p1184 = pneg %p21
  $region23: #{lstm_frame_forward.2} parent=0 // pred_check_branch
    %1186 = sbr.rel (%p1184) target = $region25
  $region24: #{lstm_frame_forward.2} parent=0 // pred_region
    %v1187 = vld [vmem:[#allocation2] sm:$0xff]
    %1188 = vst [vmem:[%s5] sm:$0xff] %v1187
    %v1189 = vld [vmem:[#allocation3] sm:$0xff]
    %1190 = vst [vmem:[%s6] sm:$0xff] %v1189
  $region25: #{lstm_frame_forward.2} parent=0 // pred_fallthru
    _
  // Predicated region
  $region26: #{lstm_frame_forward.2} parent=0 // pred_check
    _
  $region27: #{lstm_frame_forward.2} parent=0 // pred_check_branch
    %1192 = sbr.rel (0) target = $region29
  $region28: #{lstm_frame_forward.2} parent=0 // pred_region
    _
  $region29: #{lstm_frame_forward.2} parent=0 // pred_fallthru
    _
  // Predicated region
  $region30: #{lstm_frame_forward.2} parent=0 // pred_check
    _
  $region31: #{lstm_frame_forward.2} parent=0 // pred_check_branch
    %1194 = sbr.rel (0) target = $region33
  $region32: #{lstm_frame_forward.2} parent=0 // pred_region
    _
  $region33: #{lstm_frame_forward.2} parent=0 // pred_fallthru
    _
  // Predicated region
  $region34: #{lstm_frame_forward.2} parent=0 // pred_check
    _
  $region35: #{lstm_frame_forward.2} parent=0 // pred_check_branch
    %1196 = sbr.rel (0) target = $region37
  $region36: #{lstm_frame_forward.2} parent=0 // pred_region
    _
  $region37: #{lstm_frame_forward.2} parent=0 // pred_fallthru
    _
  // Predicated region
  $region38: #{lstm_frame_forward.2} parent=0 // pred_check
    _
  $region39: #{lstm_frame_forward.2} parent=0 // pred_check_branch
    %1198 = sbr.rel (0) target = $region41
  $region40: #{lstm_frame_forward.2} parent=0 // pred_region
    _
  $region41: #{lstm_frame_forward.2} parent=0 // pred_fallthru
    _
  // Predicated region
  $region42: #{lstm_frame_forward.2} parent=0 // pred_check
    _
  $region43: #{lstm_frame_forward.2} parent=0 // pred_check_branch
    %1200 = sbr.rel (0) target = $region45
  $region44: #{lstm_frame_forward.2} parent=0 // pred_region
    _
  $region45: #{lstm_frame_forward.2} parent=0 // pred_fallthru
    _
  // Predicated region
  $region46: #{lstm_frame_forward.2} parent=0 // pred_check
    _
  $region47: #{lstm_frame_forward.2} parent=0 // pred_check_branch
    %1202 = sbr.rel (0) target = $region49
  $region48: #{lstm_frame_forward.2} parent=0 // pred_region
    _
  $region49: #{lstm_frame_forward.2} parent=0 // pred_fallthru
    _

</llo_original>
